<compile_context>
chip_gen: v6e
topology: v6e:2x2x1
jax: 0.10.0
libtpu: 0.0.40
codegen_flags: <defaults>
</compile_context>

<pallas_src>
import jax
import jax.numpy as jnp
from jax.experimental import pallas as pl
from jax.experimental.pallas import tpu as pltpu


ROW_TILE_MAX = 2048                      # rows per tile, upper cap (multiple of 128)
STREAM_VMEM_BUDGET = 24 * 1024 * 1024    # bytes for double-buffered stream tiles
VMEM_LIMIT_BYTES = 64 * 1024 * 1024      # <= physical VMEM on v5e/v6e/v7x
NUM_CORE_SPLITS = 2                      # v7x: 2 TensorCores; serial (cheap) elsewhere


def _pick_tile(n_rows, bytes_per_row, row_tile_max):
    """Rows per tile: either the whole (unpadded) stream as one full-extent block,
    or a multiple-of-128 tile sized from the double-buffered VMEM budget."""
    budget_rows = (STREAM_VMEM_BUDGET // 2) // (2 * max(int(bytes_per_row), 1))
    cap = min(int(row_tile_max), int(budget_rows))
    cap = max(128, (cap // 128) * 128)
    if n_rows <= cap:
        return int(n_rows)      # single block == full array: no padding, no tail mask
    return cap                  # last block is partial; tail rows masked in-kernel


def _make_kernel(*, Nn, Ne, tn, te, n_node_blocks, n_edge_blocks,
                 tiles_per_core, total_tiles, mxu_dtype):
    def kernel(nid_ref, eid_ref, xn_ref, xe_ref, wgn_ref, wge_ref,
               bgn_ref, bge_ref, wpn_ref, wpe_ref,
               out_ref, accn_ref, acce_ref):
        c = pl.program_id(0)               # TensorCore split ("parallel")
        t = pl.program_id(1)               # row-tile step    ("arbitrary")
        g = c * tiles_per_core + t         # global row-tile index handled by this core
        B = out_ref.shape[0]

        @pl.when(t == 0)
        def _init():
            accn_ref[...] = jnp.zeros_like(accn_ref)
            acce_ref[...] = jnp.zeros_like(acce_ref)

        # Segment-index iota: built once per grid step, shared when tiles match (#8).
        seg_n = jax.lax.broadcasted_iota(jnp.int32, (B, tn), 0)
        seg_e = seg_n if te == tn else jax.lax.broadcasted_iota(jnp.int32, (B, te), 0)

        def accumulate(ids_ref, x_ref, wg_ref, bg, acc_ref, seg, tile, n_rows):
            x = x_ref[...]                                              # native dtype
            # Gate projection: VPU multiply + lane reduce in f32 (not a N=1 matmul).
            alpha = jnp.sum(x.astype(jnp.float32) * wg_ref[...],
                            axis=-1, keepdims=True) + bg                # (tile, 1)
            gated = alpha.astype(mxu_dtype) * x.astype(mxu_dtype)       # (tile, D)
            if n_rows % tile != 0:
                # Unpadded stream: the last block sticks out past the array.  Mask
                # the garbage tail rows with a select so NaN/Inf cannot leak into
                # the dot (0 * NaN hazard avoided).
                row = jax.lax.broadcasted_iota(jnp.int32, (tile, 1), 0)
                gated = jnp.where(g * tile + row < n_rows, gated,
                                  jnp.zeros_like(gated))
            # Scatter-sum over batch ids as a one-hot matmul on the MXU (f32 acc).
            onehot = (seg == ids_ref[...]).astype(mxu_dtype)             # (B, tile)
            acc_ref[...] += jnp.dot(onehot, gated,
                                    preferred_element_type=jnp.float32)

        def node_step():
            accumulate(nid_ref, xn_ref, wgn_ref, bgn_ref[0, 0], accn_ref,
                       seg_n, tn, Nn)

        def edge_step():
            accumulate(eid_ref, xe_ref, wge_ref, bge_ref[0, 0], acce_ref,
                       seg_e, te, Ne)

        # Skip a stream once its row tiles are exhausted.  Its clamped index_map
        # keeps the block index constant, so no new DMA is issued either (#1).
        if n_node_blocks < total_tiles:
            pl.when(g < n_node_blocks)(node_step)
        else:
            node_step()
        if n_edge_blocks < total_tiles:
            pl.when(g < n_edge_blocks)(edge_step)
        else:
            edge_step()

        # Per-core partial of the final linear.  The bias is added in the epilogue
        # so the per-core partials can simply be summed (#4).
        @pl.when(t == tiles_per_core - 1)
        def _finalize():
            out = (jnp.dot(accn_ref[...], wpn_ref[...],
                           preferred_element_type=jnp.float32)
                   + jnp.dot(acce_ref[...], wpe_ref[...],
                             preferred_element_type=jnp.float32))
            out_ref[...] = out.astype(out_ref.dtype)

    return kernel


def edge_gated_pooling(node_features, edge_features, node_batch, edge_batch,
                       params, num_batches, *, mxu_dtype=jnp.bfloat16,
                       row_tile_max=ROW_TILE_MAX, num_core_splits=NUM_CORE_SPLITS):
    """EdgeGatedPooling forward via one fused pallas_call + a tiny XLA epilogue."""
    Nn, Dn = node_features.shape
    Ne, De = edge_features.shape
    P = params["wp"].shape[1]
    B = int(num_batches)

    if Nn == 0 or Ne == 0 or B == 0:
        # Degenerate empty input: plain-JAX fallback (review correctness note).
        return _reference(node_features, edge_features, node_batch, edge_batch,
                          params, B)

    # Independent, budget-sized row tiles per stream (#1, #3).
    tn = _pick_tile(Nn, Dn * node_features.dtype.itemsize + 4, row_tile_max)
    te = _pick_tile(Ne, De * edge_features.dtype.itemsize + 4, row_tile_max)
    n_node_blocks = pl.cdiv(Nn, tn)
    n_edge_blocks = pl.cdiv(Ne, te)
    n_tiles = max(n_node_blocks, n_edge_blocks)

    C = max(1, int(num_core_splits))
    tiles_per_core = pl.cdiv(n_tiles, C)
    total_tiles = C * tiles_per_core

    # Row-major int32 segment ids viewed as (1, N): free reshape, no copy, no pad (#2).
    nid = node_batch.reshape(1, Nn).astype(jnp.int32)
    eid = edge_batch.reshape(1, Ne).astype(jnp.int32)

    # Gate weights as (1, D) rows (VPU reduce); gate biases as SMEM scalars.
    wgn = params["wgn"].reshape(1, Dn).astype(jnp.float32)
    wge = params["wge"].reshape(1, De).astype(jnp.float32)
    bgn = params["bgn"].reshape(1, 1).astype(jnp.float32)
    bge = params["bge"].reshape(1, 1).astype(jnp.float32)
    # Pooling weight split host-side along the concat boundary (aligned operands).
    wpn = params["wp"][:Dn, :].astype(jnp.float32)
    wpe = params["wp"][Dn:, :].astype(jnp.float32)
    bp = params["bp"].reshape(1, P).astype(jnp.float32)

    # Clamped index maps for the (possibly shorter) streams (#1).
    last_n = n_node_blocks - 1
    last_e = n_edge_blocks - 1
    nfeat_map = lambda c, t: (jnp.minimum(c * tiles_per_core + t, last_n), 0)
    nid_map = lambda c, t: (0, jnp.minimum(c * tiles_per_core + t, last_n))
    efeat_map = lambda c, t: (jnp.minimum(c * tiles_per_core + t, last_e), 0)
    eid_map = lambda c, t: (0, jnp.minimum(c * tiles_per_core + t, last_e))
    const_map = lambda c, t: (0, 0)

    kernel = _make_kernel(Nn=Nn, Ne=Ne, tn=tn, te=te,
                          n_node_blocks=n_node_blocks, n_edge_blocks=n_edge_blocks,
                          tiles_per_core=tiles_per_core, total_tiles=total_tiles,
                          mxu_dtype=mxu_dtype)

    partials = pl.pallas_call(
        kernel,
        out_shape=jax.ShapeDtypeStruct((C, B, P), jnp.float32),
        grid=(C, tiles_per_core),
        in_specs=[
            pl.BlockSpec((1, tn), nid_map),                        # node batch ids
            pl.BlockSpec((1, te), eid_map),                        # edge batch ids
            pl.BlockSpec((tn, Dn), nfeat_map),                     # node features (native dtype)
            pl.BlockSpec((te, De), efeat_map),                     # edge features (native dtype)
            pl.BlockSpec((1, Dn), const_map),                      # gate weight row (nodes)
            pl.BlockSpec((1, De), const_map),                      # gate weight row (edges)
            pl.BlockSpec(memory_space=pltpu.MemorySpace.SMEM),     # gate bias (nodes)
            pl.BlockSpec(memory_space=pltpu.MemorySpace.SMEM),     # gate bias (edges)
            pl.BlockSpec((Dn, P), const_map),                      # pooling weight, node rows
            pl.BlockSpec((De, P), const_map),                      # pooling weight, edge rows
        ],
        out_specs=pl.BlockSpec((None, B, P), lambda c, t: (c, 0, 0)),
        scratch_shapes=[
            pltpu.VMEM((B, Dn), jnp.float32),                      # node pool accumulator
            pltpu.VMEM((B, De), jnp.float32),                      # edge pool accumulator
        ],
        compiler_params=pltpu.CompilerParams(
            dimension_semantics=("parallel", "arbitrary"),
            vmem_limit_bytes=VMEM_LIMIT_BYTES,
        ),
    )(nid, eid, node_features, edge_features, wgn, wge, bgn, bge, wpn, wpe)

    # Tiny epilogue (plain XLA): combine per-core partials, add the pooling bias.
    return partials.sum(axis=0) + bp


def _reference(node_features, edge_features, node_batch, edge_batch, params,
               num_batches):
    """Plain-JAX reference matching the PyTorch forward (exact f32: no matmuls)."""
    x_n = node_features.astype(jnp.float32)
    x_e = edge_features.astype(jnp.float32)
    alpha_n = (jnp.sum(x_n * params["wgn"].reshape(1, -1), axis=-1, keepdims=True)
               + params["bgn"][0, 0])
    alpha_e = (jnp.sum(x_e * params["wge"].reshape(1, -1), axis=-1, keepdims=True)
               + params["bge"][0, 0])
    node_pool = jax.ops.segment_sum(alpha_n * x_n, node_batch,
                                    num_segments=num_batches)
    edge_pool = jax.ops.segment_sum(alpha_e * x_e, edge_batch,
                                    num_segments=num_batches)
    cat = jnp.concatenate([node_pool, edge_pool], axis=-1)
    return jnp.sum(cat[:, :, None] * params["wp"][None, :, :], axis=1) + params["bp"]


def _init_params(key, node_dim, edge_dim, pooling_dim):
    ks = jax.random.split(key, 6)

    def u(k, shape, fan_in):
        bound = 1.0 / jnp.sqrt(fan_in)
        return jax.random.uniform(k, shape, jnp.float32, -bound, bound)

    return {
        # weights stored as (in_dim, out_dim) == PyTorch Linear weight transposed
        "wgn": u(ks[0], (node_dim, 1), node_dim),
        "bgn": u(ks[1], (1, 1), node_dim),
        "wge": u(ks[2], (edge_dim, 1), edge_dim),
        "bge": u(ks[3], (1, 1), edge_dim),
        "wp":  u(ks[4], (node_dim + edge_dim, pooling_dim), node_dim + edge_dim),
        "bp":  u(ks[5], (1, pooling_dim), node_dim + edge_dim),
    }


if __name__ == "__main__":
    node_dim, edge_dim, pooling_dim = 8, 8, 16
    Nn, Ne, B = 16, 300, 2   # edges >> nodes: exercises the unequal-stream path

    key = jax.random.PRNGKey(0)
    k_nodes, k_edges, k_params = jax.random.split(key, 3)

    node_features = jax.random.normal(k_nodes, (Nn, node_dim), jnp.float32)
    edge_features = jax.random.normal(k_edges, (Ne, edge_dim), jnp.float32)
    # deterministic, sorted batch assignment; both batches populated
    node_batch = jnp.array([0] * 9 + [1] * (Nn - 9), dtype=jnp.int32)
    edge_batch = (jnp.arange(Ne) >= 170).astype(jnp.int32)

    params = _init_params(k_params, node_dim, edge_dim, pooling_dim)

    ref = _reference(node_features, edge_features, node_batch, edge_batch, params, B)
    scale = float(jnp.max(jnp.abs(ref)))

    # 1) Strict path: f32 MXU feed + forced small row tile.  Exercises multi-block
    #    streaming, unequal stream lengths (clamped index_map + pl.when skip) and
    #    the partial-last-block tail mask.
    out_f32 = edge_gated_pooling(node_features, edge_features, node_batch,
                                 edge_batch, params, B,
                                 mxu_dtype=jnp.float32, row_tile_max=128)
    out_f32 = jax.block_until_ready(out_f32)
    assert out_f32.shape == (B, pooling_dim)
    err_f32 = float(jnp.max(jnp.abs(out_f32 - ref)))
    # 2% of output scale: robust to MXU bf16-pass rounding of f32 operands while
    # still catching any scatter / masking / tiling bug.
    assert err_f32 <= 2e-2 * scale, (err_f32, scale)

    # 2) Default perf path: bf16 MXU feed, budget-sized (single-block) tiles.
    out_bf16 = edge_gated_pooling(node_features, edge_features, node_batch,
                                  edge_batch, params, B)
    out_bf16 = jax.block_until_ready(out_bf16)
    assert out_bf16.shape == (B, pooling_dim)
    err_bf16 = float(jnp.max(jnp.abs(out_bf16 - ref)))
    assert err_bf16 <= 6e-2 * scale, (err_bf16, scale)

    print("KERNEL_OK")
</pallas_src>

<mosaic_0001>
module attributes {stable_mosaic.version = 11 : i64} {
  func.func @kernel(%arg0: i32, %arg1: i32, %arg2: memref<1x16xi32, #tpu.memory_space<vmem>>, %arg3: memref<1x128xi32, #tpu.memory_space<vmem>>, %arg4: memref<16x8xf32, #tpu.memory_space<vmem>>, %arg5: memref<128x8xf32, #tpu.memory_space<vmem>>, %arg6: memref<1x8xf32, #tpu.memory_space<vmem>>, %arg7: memref<1x8xf32, #tpu.memory_space<vmem>>, %arg8: memref<1x1xf32, #tpu.memory_space<smem>>, %arg9: memref<1x1xf32, #tpu.memory_space<smem>>, %arg10: memref<8x16xf32, #tpu.memory_space<vmem>>, %arg11: memref<8x16xf32, #tpu.memory_space<vmem>>, %arg12: memref<1x2x16xf32, #tpu.memory_space<vmem>>, %arg13: memref<2x8xf32, #tpu.memory_space<vmem>>, %arg14: memref<2x8xf32, #tpu.memory_space<vmem>>) attributes {dimension_semantics = [#tpu.dimension_semantics<parallel>, #tpu.dimension_semantics<arbitrary>], iteration_bounds = array<i64: 2, 2>, scalar_prefetch = 0 : i64, scratch_operands = 2 : i64, tpu.core_type = #tpu.core_type<tc>, window_params = [{transform_indices = @transform_0, window_bounds = array<i64: 1, 16>}, {transform_indices = @transform_1, window_bounds = array<i64: 1, 128>}, {transform_indices = @transform_2, window_bounds = array<i64: 16, 8>}, {transform_indices = @transform_3, window_bounds = array<i64: 128, 8>}, {pipeline_mode = #tpu.pipeline_mode<synchronous>, transform_indices = @transform_4, window_bounds = array<i64: 1, 8>}, {pipeline_mode = #tpu.pipeline_mode<synchronous>, transform_indices = @transform_5, window_bounds = array<i64: 1, 8>}, {transform_indices = @transform_6, window_bounds = array<i64: 1, 1>}, {transform_indices = @transform_7, window_bounds = array<i64: 1, 1>}, {pipeline_mode = #tpu.pipeline_mode<synchronous>, transform_indices = @transform_8, window_bounds = array<i64: 8, 16>}, {pipeline_mode = #tpu.pipeline_mode<synchronous>, transform_indices = @transform_9, window_bounds = array<i64: 8, 16>}, {transform_indices = @transform_10, window_bounds = array<i64: 1, 2, 16>}]} {
    %c2_i32 = arith.constant 2 : i32
    %0 = arith.muli %arg0, %c2_i32 : i32
    %1 = arith.addi %0, %arg1 : i32
    %c0_i32 = arith.constant 0 : i32
    %2 = arith.cmpi eq, %arg1, %c0_i32 : i32
    %3 = arith.extui %2 : i1 to i32
    %c0_i32_0 = arith.constant 0 : i32
    %4 = arith.cmpi ne, %3, %c0_i32_0 : i32
    scf.if %4 {
      %cst = arith.constant 0.000000e+00 : f32
      %16 = vector.broadcast %cst : f32 to vector<2x8xf32>
      %c0 = arith.constant 0 : index
      %c0_5 = arith.constant 0 : index
      %17 = vector.load %arg13[%c0, %c0_5] : memref<2x8xf32, #tpu.memory_space<vmem>>, vector<2x8xf32>
      tpu.vector_store %arg13[%c0, %c0_5], %16 {strides = array<i32>} : memref<2x8xf32, #tpu.memory_space<vmem>>, vector<2x8xf32>,
      %cst_6 = arith.constant 0.000000e+00 : f32
      %18 = vector.broadcast %cst_6 : f32 to vector<2x8xf32>
      %c0_7 = arith.constant 0 : index
      %c0_8 = arith.constant 0 : index
      %19 = vector.load %arg14[%c0_7, %c0_8] : memref<2x8xf32, #tpu.memory_space<vmem>>, vector<2x8xf32>
      tpu.vector_store %arg14[%c0_7, %c0_8], %18 {strides = array<i32>} : memref<2x8xf32, #tpu.memory_space<vmem>>, vector<2x8xf32>,
    } else {
    }
    %5 = tpu.iota {dimensions = array<i32: 0>} : vector<2x16xi32>
    %6 = tpu.iota {dimensions = array<i32: 0>} : vector<2x128xi32>
    %c1_i32 = arith.constant 1 : i32
    %7 = arith.cmpi slt, %1, %c1_i32 : i32
    %8 = arith.extui %7 : i1 to i32
    %c0_i32_1 = arith.constant 0 : i32
    %9 = arith.cmpi ne, %8, %c0_i32_1 : i32
    scf.if %9 {
      %c0 = arith.constant 0 : index
      %c0_5 = arith.constant 0 : index
      %16 = memref.load %arg8[%c0, %c0_5] : memref<1x1xf32, #tpu.memory_space<smem>>
      %c0_6 = arith.constant 0 : index
      %c0_7 = arith.constant 0 : index
      %17 = vector.load %arg4[%c0_6, %c0_7] : memref<16x8xf32, #tpu.memory_space<vmem>>, vector<16x8xf32>
      %c0_8 = arith.constant 0 : index
      %c0_9 = arith.constant 0 : index
      %18 = vector.load %arg6[%c0_8, %c0_9] : memref<1x8xf32, #tpu.memory_space<vmem>>, vector<1x8xf32>
      %19 = vector.broadcast %18 : vector<1x8xf32> to vector<16x8xf32>
      %20 = arith.mulf %17, %19 : vector<16x8xf32>
      %cst = arith.constant dense<0.000000e+00> : vector<16xf32>
      %21 = vector.multi_reduction <add>, %20, %cst [1] : vector<16x8xf32> to vector<16xf32>
      %22 = vector.shape_cast %21 : vector<16xf32> to vector<16x1xf32>
      %23 = vector.broadcast %16 : f32 to vector<16x1xf32>
      %24 = arith.addf %22, %23 : vector<16x1xf32>
      %25 = vector.broadcast %24 : vector<16x1xf32> to vector<16x8xf32>
      %26 = arith.mulf %25, %17 : vector<16x8xf32>
      %c0_10 = arith.constant 0 : index
      %c0_11 = arith.constant 0 : index
      %27 = vector.load %arg2[%c0_10, %c0_11] : memref<1x16xi32, #tpu.memory_space<vmem>>, vector<1x16xi32>
      %28 = vector.broadcast %27 : vector<1x16xi32> to vector<2x16xi32>
      %29 = arith.cmpi eq, %5, %28 : vector<2x16xi32>
      %30 = arith.extui %29 : vector<2x16xi1> to vector<2x16xi32>
      %31 = arith.sitofp %30 : vector<2x16xi32> to vector<2x16xf32>
      %c0_12 = arith.constant 0 : index
      %c0_13 = arith.constant 0 : index
      %32 = vector.load %arg13[%c0_12, %c0_13] : memref<2x8xf32, #tpu.memory_space<vmem>>, vector<2x8xf32>
      %cst_14 = arith.constant dense<0.000000e+00> : vector<2x8xf32>
      %33 = tpu.matmul %31, %26, %cst_14 {dimension_numbers = #tpu.dot_dimension_numbers<[1], [0], [0], [1], [0, 0, 1, 1], [], []>} : vector<2x16xf32>, vector<16x8xf32>, vector<2x8xf32> -> vector<2x8xf32>
      %34 = arith.addf %32, %33 : vector<2x8xf32>
      %c0_15 = arith.constant 0 : index
      %c0_16 = arith.constant 0 : index
      %35 = vector.load %arg13[%c0_15, %c0_16] : memref<2x8xf32, #tpu.memory_space<vmem>>, vector<2x8xf32>
      tpu.vector_store %arg13[%c0_15, %c0_16], %34 {strides = array<i32>} : memref<2x8xf32, #tpu.memory_space<vmem>>, vector<2x8xf32>,
    } else {
    }
    %c3_i32 = arith.constant 3 : i32
    %10 = arith.cmpi slt, %1, %c3_i32 : i32
    %11 = arith.extui %10 : i1 to i32
    %c0_i32_2 = arith.constant 0 : i32
    %12 = arith.cmpi ne, %11, %c0_i32_2 : i32
    scf.if %12 {
      %c0 = arith.constant 0 : index
      %c0_5 = arith.constant 0 : index
      %16 = memref.load %arg9[%c0, %c0_5] : memref<1x1xf32, #tpu.memory_space<smem>>
      %c0_6 = arith.constant 0 : index
      %c0_7 = arith.constant 0 : index
      %17 = vector.load %arg5[%c0_6, %c0_7] : memref<128x8xf32, #tpu.memory_space<vmem>>, vector<128x8xf32>
      %c0_8 = arith.constant 0 : index
      %c0_9 = arith.constant 0 : index
      %18 = vector.load %arg7[%c0_8, %c0_9] : memref<1x8xf32, #tpu.memory_space<vmem>>, vector<1x8xf32>
      %19 = vector.broadcast %18 : vector<1x8xf32> to vector<128x8xf32>
      %20 = arith.mulf %17, %19 : vector<128x8xf32>
      %cst = arith.constant dense<0.000000e+00> : vector<128xf32>
      %21 = vector.multi_reduction <add>, %20, %cst [1] : vector<128x8xf32> to vector<128xf32>
      %22 = vector.shape_cast %21 : vector<128xf32> to vector<128x1xf32>
      %23 = vector.broadcast %16 : f32 to vector<128x1xf32>
      %24 = arith.addf %22, %23 : vector<128x1xf32>
      %25 = vector.broadcast %24 : vector<128x1xf32> to vector<128x8xf32>
      %26 = arith.mulf %25, %17 : vector<128x8xf32>
      %27 = tpu.iota {dimensions = array<i32: 0>} : vector<128x1xi32>
      %c128_i32 = arith.constant 128 : i32
      %28 = arith.muli %1, %c128_i32 : i32
      %29 = vector.broadcast %28 : i32 to vector<128x1xi32>
      %30 = arith.addi %29, %27 : vector<128x1xi32>
      %c300_i32 = arith.constant 300 : i32
      %31 = vector.broadcast %c300_i32 : i32 to vector<128x1xi32>
      %32 = arith.cmpi slt, %30, %31 : vector<128x1xi32>
      %cst_10 = arith.constant 0.000000e+00 : f32
      %33 = vector.broadcast %cst_10 : f32 to vector<128x8xf32>
      %34 = vector.shape_cast %32 : vector<128x1xi1> to vector<128x1xi1>
      %35 = vector.broadcast %34 : vector<128x1xi1> to vector<128x8xi1>
      %36 = arith.select %35, %26, %33 : vector<128x8xi1>, vector<128x8xf32>
      %c0_11 = arith.constant 0 : index
      %c0_12 = arith.constant 0 : index
      %37 = vector.load %arg3[%c0_11, %c0_12] : memref<1x128xi32, #tpu.memory_space<vmem>>, vector<1x128xi32>
      %38 = vector.broadcast %37 : vector<1x128xi32> to vector<2x128xi32>
      %39 = arith.cmpi eq, %6, %38 : vector<2x128xi32>
      %40 = arith.extui %39 : vector<2x128xi1> to vector<2x128xi32>
      %41 = arith.sitofp %40 : vector<2x128xi32> to vector<2x128xf32>
      %c0_13 = arith.constant 0 : index
      %c0_14 = arith.constant 0 : index
      %42 = vector.load %arg14[%c0_13, %c0_14] : memref<2x8xf32, #tpu.memory_space<vmem>>, vector<2x8xf32>
      %cst_15 = arith.constant dense<0.000000e+00> : vector<2x8xf32>
      %43 = tpu.matmul %41, %36, %cst_15 {dimension_numbers = #tpu.dot_dimension_numbers<[1], [0], [0], [1], [0, 0, 1, 1], [], []>} : vector<2x128xf32>, vector<128x8xf32>, vector<2x8xf32> -> vector<2x8xf32>
      %44 = arith.addf %42, %43 : vector<2x8xf32>
      %c0_16 = arith.constant 0 : index
      %c0_17 = arith.constant 0 : index
      %45 = vector.load %arg14[%c0_16, %c0_17] : memref<2x8xf32, #tpu.memory_space<vmem>>, vector<2x8xf32>
      tpu.vector_store %arg14[%c0_16, %c0_17], %44 {strides = array<i32>} : memref<2x8xf32, #tpu.memory_space<vmem>>, vector<2x8xf32>,
    } else {
    }
    %c1_i32_3 = arith.constant 1 : i32
    %13 = arith.cmpi eq, %arg1, %c1_i32_3 : i32
    %14 = arith.extui %13 : i1 to i32
    %c0_i32_4 = arith.constant 0 : i32
    %15 = arith.cmpi ne, %14, %c0_i32_4 : i32
    scf.if %15 {
      %c0 = arith.constant 0 : index
      %c0_5 = arith.constant 0 : index
      %16 = vector.load %arg13[%c0, %c0_5] : memref<2x8xf32, #tpu.memory_space<vmem>>, vector<2x8xf32>
      %c0_6 = arith.constant 0 : index
      %c0_7 = arith.constant 0 : index
      %17 = vector.load %arg10[%c0_6, %c0_7] : memref<8x16xf32, #tpu.memory_space<vmem>>, vector<8x16xf32>
      %cst = arith.constant dense<0.000000e+00> : vector<2x16xf32>
      %18 = tpu.matmul %16, %17, %cst {dimension_numbers = #tpu.dot_dimension_numbers<[1], [0], [0], [1], [0, 0, 1, 1], [], []>} : vector<2x8xf32>, vector<8x16xf32>, vector<2x16xf32> -> vector<2x16xf32>
      %c0_8 = arith.constant 0 : index
      %c0_9 = arith.constant 0 : index
      %19 = vector.load %arg14[%c0_8, %c0_9] : memref<2x8xf32, #tpu.memory_space<vmem>>, vector<2x8xf32>
      %c0_10 = arith.constant 0 : index
      %c0_11 = arith.constant 0 : index
      %20 = vector.load %arg11[%c0_10, %c0_11] : memref<8x16xf32, #tpu.memory_space<vmem>>, vector<8x16xf32>
      %cst_12 = arith.constant dense<0.000000e+00> : vector<2x16xf32>
      %21 = tpu.matmul %19, %20, %cst_12 {dimension_numbers = #tpu.dot_dimension_numbers<[1], [0], [0], [1], [0, 0, 1, 1], [], []>} : vector<2x8xf32>, vector<8x16xf32>, vector<2x16xf32> -> vector<2x16xf32>
      %22 = arith.addf %18, %21 : vector<2x16xf32>
      %c0_13 = arith.constant 0 : index
      %c0_14 = arith.constant 0 : index
      %c0_15 = arith.constant 0 : index
      %23 = vector.load %arg12[%c0_13, %c0_14, %c0_15] : memref<1x2x16xf32, #tpu.memory_space<vmem>>, vector<1x2x16xf32>
      %24 = vector.shape_cast %23 : vector<1x2x16xf32> to vector<2x16xf32>
      %25 = vector.shape_cast %22 : vector<2x16xf32> to vector<1x2x16xf32>
      tpu.vector_store %arg12[%c0_13, %c0_14, %c0_15], %25 {strides = array<i32>} : memref<1x2x16xf32, #tpu.memory_space<vmem>>, vector<1x2x16xf32>,
    } else {
    }
    return
  }
  func.func @transform_0(%arg0: i32, %arg1: i32) -> (i32, i32) {
    %c2_i32 = arith.constant 2 : i32
    %0 = arith.muli %arg0, %c2_i32 : i32
    %1 = arith.addi %0, %arg1 : i32
    %c0_i32 = arith.constant 0 : i32
    %2 = arith.minsi %1, %c0_i32 : i32
    %c0_i32_0 = arith.constant 0 : i32
    %c0_i32_1 = arith.constant 0 : i32
    return %c0_i32_0, %2 : i32, i32
  }
  func.func @transform_1(%arg0: i32, %arg1: i32) -> (i32, i32) {
    %c2_i32 = arith.constant 2 : i32
    %0 = arith.muli %arg0, %c2_i32 : i32
    %1 = arith.addi %0, %arg1 : i32
    %c2_i32_0 = arith.constant 2 : i32
    %2 = arith.minsi %1, %c2_i32_0 : i32
    %c0_i32 = arith.constant 0 : i32
    %c0_i32_1 = arith.constant 0 : i32
    return %c0_i32, %2 : i32, i32
  }
  func.func @transform_2(%arg0: i32, %arg1: i32) -> (i32, i32) {
    %c2_i32 = arith.constant 2 : i32
    %0 = arith.muli %arg0, %c2_i32 : i32
    %1 = arith.addi %0, %arg1 : i32
    %c0_i32 = arith.constant 0 : i32
    %2 = arith.minsi %1, %c0_i32 : i32
    %c0_i32_0 = arith.constant 0 : i32
    %c0_i32_1 = arith.constant 0 : i32
    return %2, %c0_i32_0 : i32, i32
  }
  func.func @transform_3(%arg0: i32, %arg1: i32) -> (i32, i32) {
    %c2_i32 = arith.constant 2 : i32
    %0 = arith.muli %arg0, %c2_i32 : i32
    %1 = arith.addi %0, %arg1 : i32
    %c2_i32_0 = arith.constant 2 : i32
    %2 = arith.minsi %1, %c2_i32_0 : i32
    %c0_i32 = arith.constant 0 : i32
    %c0_i32_1 = arith.constant 0 : i32
    return %2, %c0_i32 : i32, i32
  }
  func.func @transform_4(%arg0: i32, %arg1: i32) -> (i32, i32) {
    %c0_i32 = arith.constant 0 : i32
    %c0_i32_0 = arith.constant 0 : i32
    %c0_i32_1 = arith.constant 0 : i32
    return %c0_i32, %c0_i32_0 : i32, i32
  }
  func.func @transform_5(%arg0: i32, %arg1: i32) -> (i32, i32) {
    %c0_i32 = arith.constant 0 : i32
    %c0_i32_0 = arith.constant 0 : i32
    %c0_i32_1 = arith.constant 0 : i32
    return %c0_i32, %c0_i32_0 : i32, i32
  }
  func.func @transform_6(%arg0: i32, %arg1: i32) -> (i32, i32) {
    %c0_i32 = arith.constant 0 : i32
    %c0_i32_0 = arith.constant 0 : i32
    %c0_i32_1 = arith.constant 0 : i32
    return %c0_i32, %c0_i32_0 : i32, i32
  }
  func.func @transform_7(%arg0: i32, %arg1: i32) -> (i32, i32) {
    %c0_i32 = arith.constant 0 : i32
    %c0_i32_0 = arith.constant 0 : i32
    %c0_i32_1 = arith.constant 0 : i32
    return %c0_i32, %c0_i32_0 : i32, i32
  }
  func.func @transform_8(%arg0: i32, %arg1: i32) -> (i32, i32) {
    %c0_i32 = arith.constant 0 : i32
    %c0_i32_0 = arith.constant 0 : i32
    %c0_i32_1 = arith.constant 0 : i32
    return %c0_i32, %c0_i32_0 : i32, i32
  }
  func.func @transform_9(%arg0: i32, %arg1: i32) -> (i32, i32) {
    %c0_i32 = arith.constant 0 : i32
    %c0_i32_0 = arith.constant 0 : i32
    %c0_i32_1 = arith.constant 0 : i32
    return %c0_i32, %c0_i32_0 : i32, i32
  }
  func.func @transform_10(%arg0: i32, %arg1: i32) -> (i32, i32, i32) {
    %c0_i32 = arith.constant 0 : i32
    %c0_i32_0 = arith.constant 0 : i32
    %c0_i32_1 = arith.constant 0 : i32
    return %arg0, %c0_i32, %c0_i32_0 : i32, i32, i32
  }
}

</mosaic_0001>

<llo_original>
// kernel: tpu_custom_call.1
$region0: #{tpu_custom_call.1}
  #allocation0 [shape = 'u32[]', space=smem, size = 0x4, offset = 0x4, fixed_abs, tag = 'smem constant byte address 0x4 - core index']
  #allocation1 [shape = 'u32[144,128]{1,0:T(1,128)}', space=vmem, size = 0x12000, scoped, tag = 'internal scratch']
  #allocation2 [shape = 'f32[2,8]{1,0:T(2,128)}', space=vmem, size = 0x400, scoped, tag = 'scratch operand']
  #allocation3 [shape = 'f32[2,8]{1,0:T(2,128)}', space=vmem, size = 0x400, scoped, tag = 'scratch operand']
  #allocation4 [shape = 'f32[1,1]{1,0:T(1,128)S(6)}', space=smem, size = 0x200, scoped, tag = 'scoped memory for tpu_custom_call.1']
  #allocation5 [shape = 'f32[1,1]{1,0:T(1,128)S(6)}', space=smem, size = 0x200, scoped, tag = 'scoped memory for tpu_custom_call.1']
  %s0 = inlined_call_operand.vmem [shape: s32[1,16], index: 0, kind: input, shape index: {}]
  %s1 = inlined_call_operand.vmem [shape: s32[1,300], index: 1, kind: input, shape index: {}]
  %s2 = inlined_call_operand.vmem [shape: f32[16,8], index: 2, kind: input, shape index: {}]
  %s3 = inlined_call_operand.vmem [shape: f32[300,8], index: 3, kind: input, shape index: {}]
  %s4 = inlined_call_operand.vmem [shape: f32[1,8], index: 4, kind: input, shape index: {}]
  %s5 = inlined_call_operand.vmem [shape: f32[1,8], index: 5, kind: input, shape index: {}]
  %s6 = inlined_call_operand.<no memory space> [shape: f32[1,1], index: 6, kind: input, shape index: {}]
  %s7 = inlined_call_operand.<no memory space> [shape: f32[1,1], index: 7, kind: input, shape index: {}]
  %s8 = inlined_call_operand.vmem [shape: f32[8,16], index: 8, kind: input, shape index: {}]
  %s9 = inlined_call_operand.vmem [shape: f32[8,16], index: 9, kind: input, shape index: {}]
  %s10 = inlined_call_operand.hbm [shape: f32[2,2,16], index: 10, kind: output, shape index: {}]
  %s11 = sld [smem:[#allocation0]]
  $region89: #{tpu_custom_call.1} parent=0
    _
  %s13 = ssub.s32 1, %s11
  %s14 = scalar_select 0, %s13, %s11
  %15 = sst [smem:[#allocation4]] %s6
  %16 = sst [smem:[#allocation5]] %s7
  $region1: #{tpu_custom_call.1} parent=0
    #allocation6 [shape = 'u8[2048]{0}', space=vmem, size = 0x800, scoped, tag = 'output window, operand 0']
    #allocation7 [shape = 's32[2]{0}', space=sflag, size = 0x8, scoped, tag = 'scoped memory for tpu_custom_call.1']
    %17 = vsyncpa [#allocation7], 0
    %s18 = scalar_lea.sflag [#allocation7], 1
    %19 = vsyncpa %s18, 0
    loop: start=0, step=1, limit=6
    $region2: #{tpu_custom_call.1} parent=1 // loop_pre_header
      _
    $region3: #{tpu_custom_call.1} parent=1 // loop_header
      %s21 = sphi 0, %s25
      %p22 = scmp.ge.s32.totalorder %s21, 6
      %s28 = sphi 0, %s40
      %s29 = sphi 0, %s36
      %s30 = sphi 0, %s28
      %s31 = sphi 0, %s29
      %s32 = sphi 0, %s30
      %s33 = sphi 0, %s31
      %s51 = sphi 0, %s53
      %s54 = sphi 0, %s51
      %s55 = sphi 0, %s54
      %s71 = sphi 0, %s55
      %s85 = sphi 0, %s87
      %s88 = sphi 0, %s85
      %s89 = sphi 0, %s88
      %s105 = sphi 0, %s89
      %s119 = sphi 0, %s121
      %s122 = sphi 0, %s119
      %s123 = sphi 0, %s122
      %s139 = sphi 0, %s123
      %s153 = sphi 0, %s155
      %s156 = sphi 0, %s153
      %s157 = sphi 0, %s156
      %s173 = sphi 0, %s157
      %s177 = sphi 0, %s177
      %s179 = sphi 0, %s177
      %s180 = sphi 0, %s179
      %s194 = sphi 0, %s180
      %s198 = sphi 0, %s198
      %s200 = sphi 0, %s198
      %s201 = sphi 0, %s200
      %s215 = sphi 0, %s201
      %s219 = sphi 0, %s219
      %s221 = sphi 0, %s219
      %s222 = sphi 0, %s221
      %s236 = sphi 0, %s222
      %s240 = sphi 0, %s240
      %s242 = sphi 0, %s240
      %s243 = sphi 0, %s242
      %s257 = sphi 0, %s243
      %s261 = sphi 0, %s261
      %s263 = sphi 0, %s261
      %s264 = sphi 0, %s263
      %s278 = sphi 0, %s264
      %s282 = sphi 0, %s282
      %s284 = sphi 0, %s282
      %s285 = sphi 0, %s284
      %s299 = sphi 0, %s285
      %s305 = sphi 0, %s307
      %s308 = sphi 0, %s305
      %s309 = sphi 0, %s308
      %s325 = sphi 0, %s309
    $region4: #{tpu_custom_call.1} parent=1 // loop_header_branch
      %24 = sbr.rel (%p22) target = $region8
    $region5: #{tpu_custom_call.1} parent=1 // loop_body
      %s26 = ssub.s32 %s21, 1
      %s27 = ssub.s32 %s21, 2
      %s34 = sadd.s32 1, %s29
      %p35 = scmp.ge.s32.totalorder %s34, 2
      %s36 = scalar_select %p35, 0, %s34
      %s37 = sadd.s32 1, %s28
      %s38 = scalar_select %p35, %s37, %s28
      %p39 = scmp.ge.s32.totalorder %s38, 2
      %s40 = scalar_select %p39, 0, %s38
      %s41 = smul.u32 %s28, 2
      %s42 = sadd.s32 %s41, %s29
      %p43 = scmp.lt.s32.totalorder %s42, 0
      %s44 = scalar_select %p43, %s42, 0
      %s45 = smul.u32 %s40, 2
      %s46 = sadd.s32 %s45, %s36
      %p47 = scmp.lt.s32.totalorder %s46, 0
      %s48 = scalar_select %p47, %s46, 0
      %s49 = ssub.s32 %s44, %s48
      %p50 = scmp.eq.s32.totalorder %s49, 0
      %s52 = sadd.s32 %s51, 1
      %s53 = scalar_select %p50, %s51, %s52
      %p56 = pneg %p50
      %p57 = scmp.eq.s32.totalorder %s21, 3
      %p58 = por %p56, %p57
      %p59 = scmp.ne.s32.totalorder %s51, %s54
      %p60 = scmp.eq.s32.totalorder %s21, 0
      %p61 = por %p59, %p60
      %p62 = scmp.ne.s32.totalorder %s51, %s54
      %p63 = scmp.eq.s32.totalorder %s26, 3
      %p64 = por %p62, %p63
      %p65 = scmp.ne.s32.totalorder %s54, %s55
      %p66 = scmp.eq.s32.totalorder %s26, 0
      %p67 = por %p65, %p66
      %p68 = scmp.ne.s32.totalorder %s54, %s55
      %p69 = scmp.eq.s32.totalorder %s27, 3
      %p70 = por %p68, %p69
      %p72 = scmp.ne.s32.totalorder %s55, %s71
      %p73 = scmp.eq.s32.totalorder %s27, 0
      %p74 = por %p72, %p73
      %s75 = smul.u32 %s28, 2
      %s76 = sadd.s32 %s75, %s29
      %p77 = scmp.lt.s32.totalorder %s76, 2
      %s78 = scalar_select %p77, %s76, 2
      %s79 = smul.u32 %s40, 2
      %s80 = sadd.s32 %s79, %s36
      %p81 = scmp.lt.s32.totalorder %s80, 2
      %s82 = scalar_select %p81, %s80, 2
      %s83 = ssub.s32 %s78, %s82
      %p84 = scmp.eq.s32.totalorder %s83, 0
      %s86 = sadd.s32 %s85, 1
      %s87 = scalar_select %p84, %s85, %s86
      %p90 = pneg %p84
      %p91 = scmp.eq.s32.totalorder %s21, 3
      %p92 = por %p90, %p91
      %p93 = scmp.ne.s32.totalorder %s85, %s88
      %p94 = scmp.eq.s32.totalorder %s21, 0
      %p95 = por %p93, %p94
      %p96 = scmp.ne.s32.totalorder %s85, %s88
      %p97 = scmp.eq.s32.totalorder %s26, 3
      %p98 = por %p96, %p97
      %p99 = scmp.ne.s32.totalorder %s88, %s89
      %p100 = scmp.eq.s32.totalorder %s26, 0
      %p101 = por %p99, %p100
      %p102 = scmp.ne.s32.totalorder %s88, %s89
      %p103 = scmp.eq.s32.totalorder %s27, 3
      %p104 = por %p102, %p103
      %p106 = scmp.ne.s32.totalorder %s89, %s105
      %p107 = scmp.eq.s32.totalorder %s27, 0
      %p108 = por %p106, %p107
      %s109 = smul.u32 %s28, 2
      %s110 = sadd.s32 %s109, %s29
      %p111 = scmp.lt.s32.totalorder %s110, 0
      %s112 = scalar_select %p111, %s110, 0
      %s113 = smul.u32 %s40, 2
      %s114 = sadd.s32 %s113, %s36
      %p115 = scmp.lt.s32.totalorder %s114, 0
      %s116 = scalar_select %p115, %s114, 0
      %s117 = ssub.s32 %s112, %s116
      %p118 = scmp.eq.s32.totalorder %s117, 0
      %s120 = sadd.s32 %s119, 1
      %s121 = scalar_select %p118, %s119, %s120
      %p124 = pneg %p118
      %p125 = scmp.eq.s32.totalorder %s21, 3
      %p126 = por %p124, %p125
      %p127 = scmp.ne.s32.totalorder %s119, %s122
      %p128 = scmp.eq.s32.totalorder %s21, 0
      %p129 = por %p127, %p128
      %p130 = scmp.ne.s32.totalorder %s119, %s122
      %p131 = scmp.eq.s32.totalorder %s26, 3
      %p132 = por %p130, %p131
      %p133 = scmp.ne.s32.totalorder %s122, %s123
      %p134 = scmp.eq.s32.totalorder %s26, 0
      %p135 = por %p133, %p134
      %p136 = scmp.ne.s32.totalorder %s122, %s123
      %p137 = scmp.eq.s32.totalorder %s27, 3
      %p138 = por %p136, %p137
      %p140 = scmp.ne.s32.totalorder %s123, %s139
      %p141 = scmp.eq.s32.totalorder %s27, 0
      %p142 = por %p140, %p141
      %s143 = smul.u32 %s28, 2
      %s144 = sadd.s32 %s143, %s29
      %p145 = scmp.lt.s32.totalorder %s144, 2
      %s146 = scalar_select %p145, %s144, 2
      %s147 = smul.u32 %s40, 2
      %s148 = sadd.s32 %s147, %s36
      %p149 = scmp.lt.s32.totalorder %s148, 2
      %s150 = scalar_select %p149, %s148, 2
      %s151 = ssub.s32 %s146, %s150
      %p152 = scmp.eq.s32.totalorder %s151, 0
      %s154 = sadd.s32 %s153, 1
      %s155 = scalar_select %p152, %s153, %s154
      %p158 = pneg %p152
      %p159 = scmp.eq.s32.totalorder %s21, 3
      %p160 = por %p158, %p159
      %p161 = scmp.ne.s32.totalorder %s153, %s156
      %p162 = scmp.eq.s32.totalorder %s21, 0
      %p163 = por %p161, %p162
      %p164 = scmp.ne.s32.totalorder %s153, %s156
      %p165 = scmp.eq.s32.totalorder %s26, 3
      %p166 = por %p164, %p165
      %p167 = scmp.ne.s32.totalorder %s156, %s157
      %p168 = scmp.eq.s32.totalorder %s26, 0
      %p169 = por %p167, %p168
      %p170 = scmp.ne.s32.totalorder %s156, %s157
      %p171 = scmp.eq.s32.totalorder %s27, 3
      %p172 = por %p170, %p171
      %p174 = scmp.ne.s32.totalorder %s157, %s173
      %p175 = scmp.eq.s32.totalorder %s27, 0
      %p176 = por %p174, %p175
      %s178 = sadd.s32 %s177, 1
      %p181 = scmp.eq.s32.totalorder %s21, 3
      %p182 = scmp.ne.s32.totalorder %s177, %s179
      %p183 = scmp.eq.s32.totalorder %s21, 0
      %p184 = por %p182, %p183
      %p185 = scmp.ne.s32.totalorder %s177, %s179
      %p186 = scmp.eq.s32.totalorder %s26, 3
      %p187 = por %p185, %p186
      %p188 = scmp.ne.s32.totalorder %s179, %s180
      %p189 = scmp.eq.s32.totalorder %s26, 0
      %p190 = por %p188, %p189
      %p191 = scmp.ne.s32.totalorder %s179, %s180
      %p192 = scmp.eq.s32.totalorder %s27, 3
      %p193 = por %p191, %p192
      %p195 = scmp.ne.s32.totalorder %s180, %s194
      %p196 = scmp.eq.s32.totalorder %s27, 0
      %p197 = por %p195, %p196
      %s199 = sadd.s32 %s198, 1
      %p202 = scmp.eq.s32.totalorder %s21, 3
      %p203 = scmp.ne.s32.totalorder %s198, %s200
      %p204 = scmp.eq.s32.totalorder %s21, 0
      %p205 = por %p203, %p204
      %p206 = scmp.ne.s32.totalorder %s198, %s200
      %p207 = scmp.eq.s32.totalorder %s26, 3
      %p208 = por %p206, %p207
      %p209 = scmp.ne.s32.totalorder %s200, %s201
      %p210 = scmp.eq.s32.totalorder %s26, 0
      %p211 = por %p209, %p210
      %p212 = scmp.ne.s32.totalorder %s200, %s201
      %p213 = scmp.eq.s32.totalorder %s27, 3
      %p214 = por %p212, %p213
      %p216 = scmp.ne.s32.totalorder %s201, %s215
      %p217 = scmp.eq.s32.totalorder %s27, 0
      %p218 = por %p216, %p217
      %s220 = sadd.s32 %s219, 1
      %p223 = scmp.eq.s32.totalorder %s21, 3
      %p224 = scmp.ne.s32.totalorder %s219, %s221
      %p225 = scmp.eq.s32.totalorder %s21, 0
      %p226 = por %p224, %p225
      %p227 = scmp.ne.s32.totalorder %s219, %s221
      %p228 = scmp.eq.s32.totalorder %s26, 3
      %p229 = por %p227, %p228
      %p230 = scmp.ne.s32.totalorder %s221, %s222
      %p231 = scmp.eq.s32.totalorder %s26, 0
      %p232 = por %p230, %p231
      %p233 = scmp.ne.s32.totalorder %s221, %s222
      %p234 = scmp.eq.s32.totalorder %s27, 3
      %p235 = por %p233, %p234
      %p237 = scmp.ne.s32.totalorder %s222, %s236
      %p238 = scmp.eq.s32.totalorder %s27, 0
      %p239 = por %p237, %p238
      %s241 = sadd.s32 %s240, 1
      %p244 = scmp.eq.s32.totalorder %s21, 3
      %p245 = scmp.ne.s32.totalorder %s240, %s242
      %p246 = scmp.eq.s32.totalorder %s21, 0
      %p247 = por %p245, %p246
      %p248 = scmp.ne.s32.totalorder %s240, %s242
      %p249 = scmp.eq.s32.totalorder %s26, 3
      %p250 = por %p248, %p249
      %p251 = scmp.ne.s32.totalorder %s242, %s243
      %p252 = scmp.eq.s32.totalorder %s26, 0
      %p253 = por %p251, %p252
      %p254 = scmp.ne.s32.totalorder %s242, %s243
      %p255 = scmp.eq.s32.totalorder %s27, 3
      %p256 = por %p254, %p255
      %p258 = scmp.ne.s32.totalorder %s243, %s257
      %p259 = scmp.eq.s32.totalorder %s27, 0
      %p260 = por %p258, %p259
      %s262 = sadd.s32 %s261, 1
      %p265 = scmp.eq.s32.totalorder %s21, 3
      %p266 = scmp.ne.s32.totalorder %s261, %s263
      %p267 = scmp.eq.s32.totalorder %s21, 0
      %p268 = por %p266, %p267
      %p269 = scmp.ne.s32.totalorder %s261, %s263
      %p270 = scmp.eq.s32.totalorder %s26, 3
      %p271 = por %p269, %p270
      %p272 = scmp.ne.s32.totalorder %s263, %s264
      %p273 = scmp.eq.s32.totalorder %s26, 0
      %p274 = por %p272, %p273
      %p275 = scmp.ne.s32.totalorder %s263, %s264
      %p276 = scmp.eq.s32.totalorder %s27, 3
      %p277 = por %p275, %p276
      %p279 = scmp.ne.s32.totalorder %s264, %s278
      %p280 = scmp.eq.s32.totalorder %s27, 0
      %p281 = por %p279, %p280
      %s283 = sadd.s32 %s282, 1
      %p286 = scmp.eq.s32.totalorder %s21, 3
      %p287 = scmp.ne.s32.totalorder %s282, %s284
      %p288 = scmp.eq.s32.totalorder %s21, 0
      %p289 = por %p287, %p288
      %p290 = scmp.ne.s32.totalorder %s282, %s284
      %p291 = scmp.eq.s32.totalorder %s26, 3
      %p292 = por %p290, %p291
      %p293 = scmp.ne.s32.totalorder %s284, %s285
      %p294 = scmp.eq.s32.totalorder %s26, 0
      %p295 = por %p293, %p294
      %p296 = scmp.ne.s32.totalorder %s284, %s285
      %p297 = scmp.eq.s32.totalorder %s27, 3
      %p298 = por %p296, %p297
      %p300 = scmp.ne.s32.totalorder %s285, %s299
      %p301 = scmp.eq.s32.totalorder %s27, 0
      %p302 = por %p300, %p301
      %s303 = ssub.s32 %s28, %s40
      %p304 = scmp.eq.s32.totalorder %s303, 0
      %s306 = sadd.s32 %s305, 1
      %s307 = scalar_select %p304, %s305, %s306
      %p310 = pneg %p304
      %p311 = scmp.eq.s32.totalorder %s21, 3
      %p312 = por %p310, %p311
      %p313 = scmp.ne.s32.totalorder %s305, %s308
      %p314 = scmp.eq.s32.totalorder %s21, 0
      %p315 = por %p313, %p314
      %p316 = scmp.ne.s32.totalorder %s305, %s308
      %p317 = scmp.eq.s32.totalorder %s26, 3
      %p318 = por %p316, %p317
      %p319 = scmp.ne.s32.totalorder %s308, %s309
      %p320 = scmp.eq.s32.totalorder %s26, 0
      %p321 = por %p319, %p320
      %p322 = scmp.ne.s32.totalorder %s308, %s309
      %p323 = scmp.eq.s32.totalorder %s27, 3
      %p324 = por %p322, %p323
      %p326 = scmp.ne.s32.totalorder %s309, %s325
      %p327 = scmp.eq.s32.totalorder %s27, 0
      %p328 = por %p326, %p327
      %p329 = scmp.le.s32.totalorder 1, %s21
      %p330 = scmp.lt.s32.totalorder %s21, 5
      %p331 = pnand %p329, %p330
      %p332 = pneg %p331
      // Predicated region
      $region9: #{tpu_custom_call.1} parent=5 // pred_check
        _
      $region10: #{tpu_custom_call.1} parent=5 // pred_check_branch
        %334 = sbr.rel (%p331) target = $region12
      $region11: #{tpu_custom_call.1} parent=5 // pred_region
        %s335 = ssub.s32 %s21, 1
        // Predicated region
        $region13: #{tpu_custom_call.1} parent=11 // pred_check
          %p336 = pneg %p190
        $region14: #{tpu_custom_call.1} parent=11 // pred_check_branch
          %338 = sbr.rel (%p336) target = $region16
        $region15: #{tpu_custom_call.1} parent=11 // pred_region
          _
        $region16: #{tpu_custom_call.1} parent=11 // pred_fallthru
          _
        // Predicated region
        $region17: #{tpu_custom_call.1} parent=11 // pred_check
          %p339 = pneg %p211
        $region18: #{tpu_custom_call.1} parent=11 // pred_check_branch
          %341 = sbr.rel (%p339) target = $region20
        $region19: #{tpu_custom_call.1} parent=11 // pred_region
          _
        $region20: #{tpu_custom_call.1} parent=11 // pred_fallthru
          _
        // Predicated region
        $region21: #{tpu_custom_call.1} parent=11 // pred_check
          %p342 = pneg %p232
        $region22: #{tpu_custom_call.1} parent=11 // pred_check_branch
          %344 = sbr.rel (%p342) target = $region24
        $region23: #{tpu_custom_call.1} parent=11 // pred_region
          _
        $region24: #{tpu_custom_call.1} parent=11 // pred_fallthru
          _
        // Predicated region
        $region25: #{tpu_custom_call.1} parent=11 // pred_check
          %p345 = pneg %p253
        $region26: #{tpu_custom_call.1} parent=11 // pred_check_branch
          %347 = sbr.rel (%p345) target = $region28
        $region27: #{tpu_custom_call.1} parent=11 // pred_region
          _
        $region28: #{tpu_custom_call.1} parent=11 // pred_fallthru
          _
        // Predicated region
        $region29: #{tpu_custom_call.1} parent=11 // pred_check
          %p348 = pneg %p274
        $region30: #{tpu_custom_call.1} parent=11 // pred_check_branch
          %350 = sbr.rel (%p348) target = $region32
        $region31: #{tpu_custom_call.1} parent=11 // pred_region
          _
        $region32: #{tpu_custom_call.1} parent=11 // pred_fallthru
          _
        // Predicated region
        $region33: #{tpu_custom_call.1} parent=11 // pred_check
          %p351 = pneg %p295
        $region34: #{tpu_custom_call.1} parent=11 // pred_check_branch
          %353 = sbr.rel (%p351) target = $region36
        $region35: #{tpu_custom_call.1} parent=11 // pred_region
          _
        $region36: #{tpu_custom_call.1} parent=11 // pred_fallthru
          _
      $region12: #{tpu_custom_call.1} parent=5 // pred_fallthru
        _
      %p354 = scmp.lt.s32.totalorder %s21, 4
      // Predicated region
      $region37: #{tpu_custom_call.1} parent=5 // pred_check
        %p355 = pneg %p354
      $region38: #{tpu_custom_call.1} parent=5 // pred_check_branch
        %357 = sbr.rel (%p355) target = $region40
      $region39: #{tpu_custom_call.1} parent=5 // pred_region
        // Predicated region
        $region41: #{tpu_custom_call.1} parent=39 // pred_check
          %p358 = pneg %p61
        $region42: #{tpu_custom_call.1} parent=39 // pred_check_branch
          %360 = sbr.rel (%p358) target = $region44
        $region43: #{tpu_custom_call.1} parent=39 // pred_region
          %s361 = smul.u32 %s28, 2
          %s362 = sadd.s32 %s361, %s29
          %p363 = scmp.lt.s32.totalorder %s362, 0
          %s364 = scalar_select %p363, %s362, 0
          %p365 = scmp.lt.s32.totalorder %s364, 0
          %s366 = scalar_select %p365, %s364, 0
          %s367 = scalar_lea.vmem %s0, %s366
          %s368 = smul.u32 %s28, 2
          %s369 = sadd.s32 %s368, %s29
          %p370 = scmp.lt.s32.totalorder %s369, 0
          %s371 = scalar_select %p370, %s369, 0
        $region44: #{tpu_custom_call.1} parent=39 // pred_fallthru
          _
        // Predicated region
        $region45: #{tpu_custom_call.1} parent=39 // pred_check
          %p372 = pneg %p95
        $region46: #{tpu_custom_call.1} parent=39 // pred_check_branch
          %374 = sbr.rel (%p372) target = $region48
        $region47: #{tpu_custom_call.1} parent=39 // pred_region
          %s375 = smul.u32 %s28, 2
          %s376 = sadd.s32 %s375, %s29
          %p377 = scmp.lt.s32.totalorder %s376, 2
          %s378 = scalar_select %p377, %s376, 2
          %p379 = scmp.lt.s32.totalorder %s378, 2
          %s380 = scalar_select %p379, %s378, 2
          %s381 = scalar_lea.vmem %s1, %s380
          %s382 = smul.u32 %s28, 2
          %s383 = sadd.s32 %s382, %s29
          %p384 = scmp.lt.s32.totalorder %s383, 2
          %s385 = scalar_select %p384, %s383, 2
        $region48: #{tpu_custom_call.1} parent=39 // pred_fallthru
          _
        // Predicated region
        $region49: #{tpu_custom_call.1} parent=39 // pred_check
          %p386 = pneg %p129
        $region50: #{tpu_custom_call.1} parent=39 // pred_check_branch
          %388 = sbr.rel (%p386) target = $region52
        $region51: #{tpu_custom_call.1} parent=39 // pred_region
          %s389 = smul.u32 %s28, 2
          %s390 = sadd.s32 %s389, %s29
          %p391 = scmp.lt.s32.totalorder %s390, 0
          %s392 = scalar_select %p391, %s390, 0
          %s393 = smul.u32 2, %s392
          %p394 = scmp.lt.s32.totalorder %s393, 1
          %s395 = scalar_select %p394, %s393, 1
          %s396 = smul.addr %s395, 8
          %s397 = scalar_lea.vmem %s2, %s396
          %s398 = smul.u32 %s28, 2
          %s399 = sadd.s32 %s398, %s29
          %p400 = scmp.lt.s32.totalorder %s399, 0
          %s401 = scalar_select %p400, %s399, 0
          %s402 = smul.u32 2, %s401
        $region52: #{tpu_custom_call.1} parent=39 // pred_fallthru
          _
        // Predicated region
        $region53: #{tpu_custom_call.1} parent=39 // pred_check
          %p403 = pneg %p163
        $region54: #{tpu_custom_call.1} parent=39 // pred_check_branch
          %405 = sbr.rel (%p403) target = $region56
        $region55: #{tpu_custom_call.1} parent=39 // pred_region
          %s406 = smul.u32 %s28, 2
          %s407 = sadd.s32 %s406, %s29
          %p408 = scmp.lt.s32.totalorder %s407, 2
          %s409 = scalar_select %p408, %s407, 2
          %s410 = smul.u32 16, %s409
          %s411 = ssub.s32 38, %s410
          %p412 = scmp.lt.s32.totalorder %s411, 16
          %s413 = scalar_select %p412, %s411, 16
          %s414 = smul.u32 128, %s413
          %p415 = scmp.lt.s32.totalorder %s410, 37
          %s416 = scalar_select %p415, %s410, 37
          %s417 = smul.addr %s416, 8
          %s418 = scalar_lea.vmem %s3, %s417
          %s419 = smul.u32 %s28, 2
          %s420 = sadd.s32 %s419, %s29
          %p421 = scmp.lt.s32.totalorder %s420, 2
          %s422 = scalar_select %p421, %s420, 2
          %s423 = smul.u32 16, %s422
          %s424 = ssub.s32 38, %s423
          %p425 = scmp.lt.s32.totalorder %s424, 16
          %s426 = scalar_select %p425, %s424, 16
          %s427 = smul.u32 128, %s426
        $region56: #{tpu_custom_call.1} parent=39 // pred_fallthru
          _
      $region40: #{tpu_custom_call.1} parent=5 // pred_fallthru
        _
      %p428 = scmp.le.s32.totalorder 1, %s21
      %p429 = scmp.lt.s32.totalorder %s21, 5
      %p430 = pnand %p428, %p429
      %p431 = pneg %p430
      // Predicated region
      $region57: #{tpu_custom_call.1} parent=5 // pred_check
        _
      $region58: #{tpu_custom_call.1} parent=5 // pred_check_branch
        %433 = sbr.rel (%p430) target = $region60
      $region59: #{tpu_custom_call.1} parent=5 // pred_region
        %s434 = ssub.s32 %s21, 1
        %s435 = smul.u32 %s30, 2
        %s436 = sadd.s32 %s435, %s31
        %p437 = scmp.lt.s32.totalorder %s436, 0
        %s438 = scalar_select %p437, %s436, 0
        %p439 = scmp.lt.s32.totalorder %s438, 0
        %s440 = scalar_select %p439, %s438, 0
        %s441 = scalar_lea.vmem %s0, %s440
        %p442 = pneg %p67
        %p443 = pneg %p64
        %s444 = smul.u32 %s30, 2
        %s445 = sadd.s32 %s444, %s31
        %p446 = scmp.lt.s32.totalorder %s445, 2
        %s447 = scalar_select %p446, %s445, 2
        %p448 = scmp.lt.s32.totalorder %s447, 2
        %s449 = scalar_select %p448, %s447, 2
        %s450 = scalar_lea.vmem %s1, %s449
        %p451 = pneg %p101
        %p452 = pneg %p98
        %s453 = smul.u32 %s30, 2
        %s454 = sadd.s32 %s453, %s31
        %p455 = scmp.lt.s32.totalorder %s454, 0
        %s456 = scalar_select %p455, %s454, 0
        %s457 = smul.u32 2, %s456
        %p458 = scmp.lt.s32.totalorder %s457, 1
        %s459 = scalar_select %p458, %s457, 1
        %s460 = smul.addr %s459, 8
        %s461 = scalar_lea.vmem %s2, %s460
        %p462 = pneg %p135
        %p463 = pneg %p132
        %s464 = smul.u32 %s30, 2
        %s465 = sadd.s32 %s464, %s31
        %p466 = scmp.lt.s32.totalorder %s465, 2
        %s467 = scalar_select %p466, %s465, 2
        %s468 = smul.u32 16, %s467
        %s469 = ssub.s32 38, %s468
        %p470 = scmp.lt.s32.totalorder %s469, 16
        %s471 = scalar_select %p470, %s469, 16
        %s472 = smul.u32 128, %s471
        %p473 = scmp.lt.s32.totalorder %s468, 37
        %s474 = scalar_select %p473, %s468, 37
        %s475 = smul.addr %s474, 8
        %s476 = scalar_lea.vmem %s3, %s475
        %p477 = pneg %p169
        %p478 = pneg %p166
        %p479 = pneg %p190
        %p480 = pneg %p187
        %p481 = pneg %p211
        %p482 = pneg %p208
        %p483 = pneg %p232
        %p484 = pneg %p229
        %p485 = pneg %p253
        %p486 = pneg %p250
        %p487 = pneg %p274
        %p488 = pneg %p271
        %p489 = pneg %p295
        %p490 = pneg %p292
        %p491 = pneg %p321
        %p492 = pneg %p318
        %s493 = sand.u32 %s308, 1
        %s494 = scalar_lea.sflag [#allocation7], %s493
        %s495 = sand.u32 %s308, 1
        %s496 = smul.addr %s495, 2
        %s497 = scalar_lea.vmem [#allocation6], %s496
        %s498 = smul.u32 %s30, 2
        %s499 = sadd.s32 %s498, %s31
        %p500 = scmp.lt.s32.totalorder %s499, 0
        %s501 = scalar_select %p500, %s499, 0
        %p502 = scmp.lt.s32.totalorder %s501, 0
        %s503 = scalar_select %p502, %s501, 0
        %s504 = scalar_lea.vmem %s0, %s503
        %s505 = smul.u32 %s30, 2
        %s506 = sadd.s32 %s505, %s31
        %p507 = scmp.lt.s32.totalorder %s506, 0
        %s508 = scalar_select %p507, %s506, 0
        %s509 = smul.u32 %s30, 2
        %s510 = sadd.s32 %s509, %s31
        %p511 = scmp.lt.s32.totalorder %s510, 2
        %s512 = scalar_select %p511, %s510, 2
        %p513 = scmp.lt.s32.totalorder %s512, 2
        %s514 = scalar_select %p513, %s512, 2
        %s515 = scalar_lea.vmem %s1, %s514
        %s516 = smul.u32 %s30, 2
        %s517 = sadd.s32 %s516, %s31
        %p518 = scmp.lt.s32.totalorder %s517, 2
        %s519 = scalar_select %p518, %s517, 2
        %s520 = smul.u32 %s30, 2
        %s521 = sadd.s32 %s520, %s31
        %p522 = scmp.lt.s32.totalorder %s521, 0
        %s523 = scalar_select %p522, %s521, 0
        %s524 = smul.u32 2, %s523
        %p525 = scmp.lt.s32.totalorder %s524, 1
        %s526 = scalar_select %p525, %s524, 1
        %s527 = smul.addr %s526, 8
        %s528 = scalar_lea.vmem %s2, %s527
        %s529 = smul.u32 %s30, 2
        %s530 = sadd.s32 %s529, %s31
        %p531 = scmp.lt.s32.totalorder %s530, 0
        %s532 = scalar_select %p531, %s530, 0
        %s533 = smul.u32 2, %s532
        %s534 = smul.u32 %s30, 2
        %s535 = sadd.s32 %s534, %s31
        %p536 = scmp.lt.s32.totalorder %s535, 2
        %s537 = scalar_select %p536, %s535, 2
        %s538 = smul.u32 16, %s537
        %s539 = ssub.s32 38, %s538
        %p540 = scmp.lt.s32.totalorder %s539, 16
        %s541 = scalar_select %p540, %s539, 16
        %s542 = smul.u32 128, %s541
        %p543 = scmp.lt.s32.totalorder %s538, 37
        %s544 = scalar_select %p543, %s538, 37
        %s545 = smul.addr %s544, 8
        %s546 = scalar_lea.vmem %s3, %s545
        %s547 = smul.u32 %s30, 2
        %s548 = sadd.s32 %s547, %s31
        %p549 = scmp.lt.s32.totalorder %s548, 2
        %s550 = scalar_select %p549, %s548, 2
        %s551 = smul.u32 16, %s550
        %s552 = ssub.s32 38, %s551
        %p553 = scmp.lt.s32.totalorder %s552, 16
        %s554 = scalar_select %p553, %s552, 16
        %s555 = smul.u32 128, %s554
        %s556 = smul.u32 %s30, 2
        %s557 = sadd.s32 %s556, %s31
        %p558 = scmp.eq.s32.totalorder %s31, 0
        // Predicated region
        $region61: #{tpu_custom_call.1} parent=59 // pred_check
          %p559 = pneg %p558
        $region62: #{tpu_custom_call.1} parent=59 // pred_check_branch
          %561 = sbr.rel (%p559) target = $region64
        $region63: #{tpu_custom_call.1} parent=59 // pred_region
          %vm562 = vcmask 58368
          %563 = vst.msk [vmem:[#allocation2] sm:$0x3] %vm562, 0.0
          %564 = vst.msk [vmem:[#allocation3] sm:$0x3] %vm562, 0.0
        $region64: #{tpu_custom_call.1} parent=59 // pred_fallthru
          _
        %v565 = vlaneseq
        %v566 = vshrl.u32 %v565, 7
        %p567 = scmp.lt.s32.totalorder %s557, 1
        // Predicated region
        $region65: #{tpu_custom_call.1} parent=59 // pred_check
          %p568 = pneg %p567
        $region66: #{tpu_custom_call.1} parent=59 // pred_check_branch
          %570 = sbr.rel (%p568) target = $region68
        $region67: #{tpu_custom_call.1} parent=59 // pred_region
          %s571 = sld [smem:[#allocation4]]
          %v572 = vld [vmem:[%s528] sm:$0xff]
          %v573 = vld [vmem:[%s528 + $0x8] sm:$0xff]
          %v574 = vld [vmem:[%s4] sm:$0x1]
          %v576 = vlaneseq
          %v577 = vshrl.u32 %v576, 7
          %v578 = vsub.s32 0, %v577
          %v579 = vrot.slane %v574, %v578
          %v581 = vmul.f32 %v572, %v579
          %v582 = vmul.f32 %v573, %v579
          %vm583 = vcmask 64512
          %v584 = vsel %vm583, %v581, 0.0
          %585 = vadd.xlane.f32.xlu0 %v584
          %v586 = vpop.xlane.xlu0 %585
          %v587 = vsel %vm583, %v582, 0.0
          %588 = vadd.xlane.f32.xlu0 %v587
          %v589 = vpop.xlane.xlu0 %588
          %v590 = vstv %s571
          %v591 = vadd.f32 %v586, %v590
          %v592 = vadd.f32 %v589, %v590
          %v593 = vmul.f32 %v591, %v572
          %v594 = vmul.f32 %v592, %v573
          %v595 = vld [vmem:[%s504] sm:$0x1]
          %v596 = vlaneseq
          %v597 = vshrl.u32 %v596, 7
          %v598 = vsub.s32 0, %v597
          %v599 = vrot.slane %v595, %v598
          %vm600 = vcmp.eq.s32.totalorder %v566, %v599
          %v601 = vsel %vm600, 1, 0
          %v602 = vcvt.s32.f32 %v601
          %v603 = vld [vmem:[#allocation2] sm:$0x3]
          %vm604 = vcmask 130048
          %v606 = vsel %vm604, %v602, 0
          %608 = vmatprep.subr.mxu0 0.0
          %609 = vmatpush1.msra.mxu0 0.0
          %610 = vmatprep.subr.mxu0 0.0
          %611 = vmatpush1.msra.mxu0 0.0
          %612 = vmatprep.subr.mxu0 0.0
          %613 = vmatpush1.msra.mxu0 0.0
          %614 = vmatprep.subr.mxu0 0.0
          %615 = vmatpush1.msra.mxu0 0.0
          %616 = vmatprep.subr.mxu0 0.0
          %617 = vmatpush1.msra.mxu0 0.0
          %618 = vmatprep.subr.mxu0 0.0
          %619 = vmatpush1.msra.mxu0 0.0
          %620 = vmatprep.subr.mxu0 0.0
          %621 = vmatpush1.msra.mxu0 0.0
          %622 = vmatprep.subr.mxu0 0.0
          %623 = vmatpush1.msra.mxu0 0.0
          %624 = vmatprep.subr.mxu0 0.0
          %625 = vmatpush1.msra.mxu0 0.0
          %626 = vmatprep.subr.mxu0 0.0
          %627 = vmatpush1.msra.mxu0 0.0
          %628 = vmatprep.subr.mxu0 0.0
          %629 = vmatpush1.msra.mxu0 0.0
          %630 = vmatprep.subr.mxu0 0.0
          %631 = vmatpush1.msra.mxu0 0.0
          %632 = vmatprep.subr.mxu0 0.0
          %633 = vmatpush1.msra.mxu0 0.0
          %634 = vmatprep.subr.mxu0 0.0
          %635 = vmatpush1.msra.mxu0 0.0
          %636 = vmatprep.subr.mxu0 0.0
          %637 = vmatpush1.msra.mxu0 %v594
          %638 = vmatprep.subr.mxu0 0.0
          %639 = vmatpush1.msra.mxu0 %v593
          %640 = vmatprep.subr.mxu0 0.0
          %641 = vmatpush2.msra.mxu0 0.0
          %642 = vmatprep.subr.mxu0 0.0
          %643 = vmatpush2.msra.mxu0 0.0
          %644 = vmatprep.subr.mxu0 0.0
          %645 = vmatpush2.msra.mxu0 0.0
          %646 = vmatprep.subr.mxu0 0.0
          %647 = vmatpush2.msra.mxu0 0.0
          %648 = vmatprep.subr.mxu0 0.0
          %649 = vmatpush2.msra.mxu0 0.0
          %650 = vmatprep.subr.mxu0 0.0
          %651 = vmatpush2.msra.mxu0 0.0
          %652 = vmatprep.subr.mxu0 0.0
          %653 = vmatpush2.msra.mxu0 0.0
          %654 = vmatprep.subr.mxu0 0.0
          %655 = vmatpush2.msra.mxu0 0.0
          %656 = vmatprep.subr.mxu0 0.0
          %657 = vmatpush2.msra.mxu0 0.0
          %658 = vmatprep.subr.mxu0 0.0
          %659 = vmatpush2.msra.mxu0 0.0
          %660 = vmatprep.subr.mxu0 0.0
          %661 = vmatpush2.msra.mxu0 0.0
          %662 = vmatprep.subr.mxu0 0.0
          %663 = vmatpush2.msra.mxu0 0.0
          %664 = vmatprep.subr.mxu0 0.0
          %665 = vmatpush2.msra.mxu0 0.0
          %666 = vmatprep.subr.mxu0 0.0
          %667 = vmatpush2.msra.mxu0 0.0
          %668 = vmatprep.subr.mxu0 0.0
          %669 = vmatpush2.msra.mxu0 0.0
          %670 = vmatprep.subr.mxu0 0.0
          %671 = vmatpush2.msra.mxu0 0.0
          %672 = vmatprep.mubr.f32.mxu0 0.0
          %673 = vmatmul.mubr.f32.gmra.mxu0 %v606
          %v674 = vpop.f32.mrf.mxu0
          %v675 = vadd.f32 0.0, %v674
          %v676 = vpop.f32.mrf.mxu0
          %677 = vdwg.mxu0
          %v678 = vadd.f32 %v603, %v675
          %vm679 = vcmask 58368
          %680 = vst.msk [vmem:[#allocation2] sm:$0x3] %vm679, %v678
        $region68: #{tpu_custom_call.1} parent=59 // pred_fallthru
          _
        %p681 = scmp.lt.s32.totalorder %s557, 3
        // Predicated region
        $region69: #{tpu_custom_call.1} parent=59 // pred_check
          %p682 = pneg %p681
        $region70: #{tpu_custom_call.1} parent=59 // pred_check_branch
          %684 = sbr.rel (%p682) target = $region72
        $region71: #{tpu_custom_call.1} parent=59 // pred_region
          %s685 = sld [smem:[#allocation5]]
          %v686 = vld [vmem:[%s546] sm:$0xff]
          %v687 = vld [vmem:[%s546 + $0x8] sm:$0xff]
          %v688 = vld [vmem:[%s546 + $0x10] sm:$0xff]
          %v689 = vld [vmem:[%s546 + $0x18] sm:$0xff]
          %v690 = vld [vmem:[%s546 + $0x20] sm:$0xff]
          %v691 = vld [vmem:[%s546 + $0x28] sm:$0xff]
          %v692 = vld [vmem:[%s546 + $0x30] sm:$0xff]
          %v693 = vld [vmem:[%s546 + $0x38] sm:$0xff]
          %v694 = vld [vmem:[%s546 + $0x40] sm:$0xff]
          %v695 = vld [vmem:[%s546 + $0x48] sm:$0xff]
          %v696 = vld [vmem:[%s546 + $0x50] sm:$0xff]
          %v697 = vld [vmem:[%s546 + $0x58] sm:$0xff]
          %v698 = vld [vmem:[%s546 + $0x60] sm:$0xff]
          %v699 = vld [vmem:[%s546 + $0x68] sm:$0xff]
          %v700 = vld [vmem:[%s546 + $0x70] sm:$0xff]
          %v701 = vld [vmem:[%s546 + $0x78] sm:$0xff]
          %v702 = vld [vmem:[%s5] sm:$0x1]
          %v704 = vlaneseq
          %v705 = vshrl.u32 %v704, 7
          %v706 = vsub.s32 0, %v705
          %v707 = vrot.slane %v702, %v706
          %v709 = vmul.f32 %v686, %v707
          %v710 = vmul.f32 %v687, %v707
          %v711 = vmul.f32 %v688, %v707
          %v712 = vmul.f32 %v689, %v707
          %v713 = vmul.f32 %v690, %v707
          %v714 = vmul.f32 %v691, %v707
          %v715 = vmul.f32 %v692, %v707
          %v716 = vmul.f32 %v693, %v707
          %v717 = vmul.f32 %v694, %v707
          %v718 = vmul.f32 %v695, %v707
          %v719 = vmul.f32 %v696, %v707
          %v720 = vmul.f32 %v697, %v707
          %v721 = vmul.f32 %v698, %v707
          %v722 = vmul.f32 %v699, %v707
          %v723 = vmul.f32 %v700, %v707
          %v724 = vmul.f32 %v701, %v707
          %vm725 = vcmask 64512
          %v726 = vsel %vm725, %v709, 0.0
          %727 = vadd.xlane.f32.xlu0 %v726
          %v728 = vpop.xlane.xlu0 %727
          %v729 = vsel %vm725, %v710, 0.0
          %730 = vadd.xlane.f32.xlu0 %v729
          %v731 = vpop.xlane.xlu0 %730
          %v732 = vsel %vm725, %v711, 0.0
          %733 = vadd.xlane.f32.xlu0 %v732
          %v734 = vpop.xlane.xlu0 %733
          %v735 = vsel %vm725, %v712, 0.0
          %736 = vadd.xlane.f32.xlu0 %v735
          %v737 = vpop.xlane.xlu0 %736
          %v738 = vsel %vm725, %v713, 0.0
          %739 = vadd.xlane.f32.xlu0 %v738
          %v740 = vpop.xlane.xlu0 %739
          %v741 = vsel %vm725, %v714, 0.0
          %742 = vadd.xlane.f32.xlu0 %v741
          %v743 = vpop.xlane.xlu0 %742
          %v744 = vsel %vm725, %v715, 0.0
          %745 = vadd.xlane.f32.xlu0 %v744
          %v746 = vpop.xlane.xlu0 %745
          %v747 = vsel %vm725, %v716, 0.0
          %748 = vadd.xlane.f32.xlu0 %v747
          %v749 = vpop.xlane.xlu0 %748
          %v750 = vsel %vm725, %v717, 0.0
          %751 = vadd.xlane.f32.xlu0 %v750
          %v752 = vpop.xlane.xlu0 %751
          %v753 = vsel %vm725, %v718, 0.0
          %754 = vadd.xlane.f32.xlu0 %v753
          %v755 = vpop.xlane.xlu0 %754
          %v756 = vsel %vm725, %v719, 0.0
          %757 = vadd.xlane.f32.xlu0 %v756
          %v758 = vpop.xlane.xlu0 %757
          %v759 = vsel %vm725, %v720, 0.0
          %760 = vadd.xlane.f32.xlu0 %v759
          %v761 = vpop.xlane.xlu0 %760
          %v762 = vsel %vm725, %v721, 0.0
          %763 = vadd.xlane.f32.xlu0 %v762
          %v764 = vpop.xlane.xlu0 %763
          %v765 = vsel %vm725, %v722, 0.0
          %766 = vadd.xlane.f32.xlu0 %v765
          %v767 = vpop.xlane.xlu0 %766
          %v768 = vsel %vm725, %v723, 0.0
          %769 = vadd.xlane.f32.xlu0 %v768
          %v770 = vpop.xlane.xlu0 %769
          %v771 = vsel %vm725, %v724, 0.0
          %772 = vadd.xlane.f32.xlu0 %v771
          %v773 = vpop.xlane.xlu0 %772
          %v774 = vstv %s685
          %v775 = vadd.f32 %v728, %v774
          %v776 = vadd.f32 %v731, %v774
          %v777 = vadd.f32 %v734, %v774
          %v778 = vadd.f32 %v737, %v774
          %v779 = vadd.f32 %v740, %v774
          %v780 = vadd.f32 %v743, %v774
          %v781 = vadd.f32 %v746, %v774
          %v782 = vadd.f32 %v749, %v774
          %v783 = vadd.f32 %v752, %v774
          %v784 = vadd.f32 %v755, %v774
          %v785 = vadd.f32 %v758, %v774
          %v786 = vadd.f32 %v761, %v774
          %v787 = vadd.f32 %v764, %v774
          %v788 = vadd.f32 %v767, %v774
          %v789 = vadd.f32 %v770, %v774
          %v790 = vadd.f32 %v773, %v774
          %v791 = vmul.f32 %v775, %v686
          %v792 = vmul.f32 %v776, %v687
          %v793 = vmul.f32 %v777, %v688
          %v794 = vmul.f32 %v778, %v689
          %v795 = vmul.f32 %v779, %v690
          %v796 = vmul.f32 %v780, %v691
          %v797 = vmul.f32 %v781, %v692
          %v798 = vmul.f32 %v782, %v693
          %v799 = vmul.f32 %v783, %v694
          %v800 = vmul.f32 %v784, %v695
          %v801 = vmul.f32 %v785, %v696
          %v802 = vmul.f32 %v786, %v697
          %v803 = vmul.f32 %v787, %v698
          %v804 = vmul.f32 %v788, %v699
          %v805 = vmul.f32 %v789, %v700
          %v806 = vmul.f32 %v790, %v701
          %v807 = vadd.s32 %v566, 8
          %v808 = vadd.s32 %v566, 16
          %v809 = vadd.s32 %v566, 24
          %v810 = vadd.s32 %v566, 32
          %v811 = vadd.s32 %v566, 40
          %v812 = vadd.s32 %v566, 48
          %v813 = vadd.s32 %v566, 56
          %v814 = vadd.s32 %v566, 64
          %v815 = vadd.s32 %v566, 72
          %v816 = vadd.s32 %v566, 80
          %v817 = vadd.s32 %v566, 88
          %v818 = vadd.s32 %v566, 96
          %v819 = vadd.s32 %v566, 104
          %v820 = vadd.s32 %v566, 112
          %v821 = vadd.s32 %v566, 120
          %s822 = smul.u32 %s557, 128
          %v823 = vstv %s822
          %v824 = vadd.s32 %v823, %v566
          %v825 = vadd.s32 %v823, %v807
          %v826 = vadd.s32 %v823, %v808
          %v827 = vadd.s32 %v823, %v809
          %v828 = vadd.s32 %v823, %v810
          %v829 = vadd.s32 %v823, %v811
          %v830 = vadd.s32 %v823, %v812
          %v831 = vadd.s32 %v823, %v813
          %v832 = vadd.s32 %v823, %v814
          %v833 = vadd.s32 %v823, %v815
          %v834 = vadd.s32 %v823, %v816
          %v835 = vadd.s32 %v823, %v817
          %v836 = vadd.s32 %v823, %v818
          %v837 = vadd.s32 %v823, %v819
          %v838 = vadd.s32 %v823, %v820
          %v839 = vadd.s32 %v823, %v821
          %vm840 = vcmp.lt.s32.totalorder %v824, 300
          %vm841 = vcmp.lt.s32.totalorder %v825, 300
          %vm842 = vcmp.lt.s32.totalorder %v826, 300
          %vm843 = vcmp.lt.s32.totalorder %v827, 300
          %vm844 = vcmp.lt.s32.totalorder %v828, 300
          %vm845 = vcmp.lt.s32.totalorder %v829, 300
          %vm846 = vcmp.lt.s32.totalorder %v830, 300
          %vm847 = vcmp.lt.s32.totalorder %v831, 300
          %vm848 = vcmp.lt.s32.totalorder %v832, 300
          %vm849 = vcmp.lt.s32.totalorder %v833, 300
          %vm850 = vcmp.lt.s32.totalorder %v834, 300
          %vm851 = vcmp.lt.s32.totalorder %v835, 300
          %vm852 = vcmp.lt.s32.totalorder %v836, 300
          %vm853 = vcmp.lt.s32.totalorder %v837, 300
          %vm854 = vcmp.lt.s32.totalorder %v838, 300
          %vm855 = vcmp.lt.s32.totalorder %v839, 300
          %v856 = vsel %vm840, 1, 0
          %v857 = vsel %vm841, 1, 0
          %v858 = vsel %vm842, 1, 0
          %v859 = vsel %vm843, 1, 0
          %v860 = vsel %vm844, 1, 0
          %v861 = vsel %vm845, 1, 0
          %v862 = vsel %vm846, 1, 0
          %v863 = vsel %vm847, 1, 0
          %v864 = vsel %vm848, 1, 0
          %v865 = vsel %vm849, 1, 0
          %v866 = vsel %vm850, 1, 0
          %v867 = vsel %vm851, 1, 0
          %v868 = vsel %vm852, 1, 0
          %v869 = vsel %vm853, 1, 0
          %v870 = vsel %vm854, 1, 0
          %v871 = vsel %vm855, 1, 0
          %vm872 = vcmp.eq.s32.totalorder %v856, 1
          %vm873 = vcmp.eq.s32.totalorder %v857, 1
          %vm874 = vcmp.eq.s32.totalorder %v858, 1
          %vm875 = vcmp.eq.s32.totalorder %v859, 1
          %vm876 = vcmp.eq.s32.totalorder %v860, 1
          %vm877 = vcmp.eq.s32.totalorder %v861, 1
          %vm878 = vcmp.eq.s32.totalorder %v862, 1
          %vm879 = vcmp.eq.s32.totalorder %v863, 1
          %vm880 = vcmp.eq.s32.totalorder %v864, 1
          %vm881 = vcmp.eq.s32.totalorder %v865, 1
          %vm882 = vcmp.eq.s32.totalorder %v866, 1
          %vm883 = vcmp.eq.s32.totalorder %v867, 1
          %vm884 = vcmp.eq.s32.totalorder %v868, 1
          %vm885 = vcmp.eq.s32.totalorder %v869, 1
          %vm886 = vcmp.eq.s32.totalorder %v870, 1
          %vm887 = vcmp.eq.s32.totalorder %v871, 1
          %v888 = vsel %vm872, %v791, 0.0
          %v889 = vsel %vm873, %v792, 0.0
          %v890 = vsel %vm874, %v793, 0.0
          %v891 = vsel %vm875, %v794, 0.0
          %v892 = vsel %vm876, %v795, 0.0
          %v893 = vsel %vm877, %v796, 0.0
          %v894 = vsel %vm878, %v797, 0.0
          %v895 = vsel %vm879, %v798, 0.0
          %v896 = vsel %vm880, %v799, 0.0
          %v897 = vsel %vm881, %v800, 0.0
          %v898 = vsel %vm882, %v801, 0.0
          %v899 = vsel %vm883, %v802, 0.0
          %v900 = vsel %vm884, %v803, 0.0
          %v901 = vsel %vm885, %v804, 0.0
          %v902 = vsel %vm886, %v805, 0.0
          %v903 = vsel %vm887, %v806, 0.0
          %v904 = vld [vmem:[%s515] sm:$0x1]
          %v905 = vlaneseq
          %v906 = vshrl.u32 %v905, 7
          %v907 = vsub.s32 0, %v906
          %v908 = vrot.slane %v904, %v907
          %vm909 = vcmp.eq.s32.totalorder %v566, %v908
          %v910 = vsel %vm909, 1, 0
          %v911 = vcvt.s32.f32 %v910
          %v912 = vld [vmem:[#allocation3] sm:$0x3]
          %913 = vmatprep.subr.mxu0 0.0
          %914 = vmatpush1.msra.mxu0 %v903
          %915 = vmatprep.subr.mxu0 0.0
          %916 = vmatpush1.msra.mxu0 %v902
          %917 = vmatprep.subr.mxu0 0.0
          %918 = vmatpush1.msra.mxu0 %v901
          %919 = vmatprep.subr.mxu0 0.0
          %920 = vmatpush1.msra.mxu0 %v900
          %921 = vmatprep.subr.mxu0 0.0
          %922 = vmatpush1.msra.mxu0 %v899
          %923 = vmatprep.subr.mxu0 0.0
          %924 = vmatpush1.msra.mxu0 %v898
          %925 = vmatprep.subr.mxu0 0.0
          %926 = vmatpush1.msra.mxu0 %v897
          %927 = vmatprep.subr.mxu0 0.0
          %928 = vmatpush1.msra.mxu0 %v896
          %929 = vmatprep.subr.mxu0 0.0
          %930 = vmatpush1.msra.mxu0 %v895
          %931 = vmatprep.subr.mxu0 0.0
          %932 = vmatpush1.msra.mxu0 %v894
          %933 = vmatprep.subr.mxu0 0.0
          %934 = vmatpush1.msra.mxu0 %v893
          %935 = vmatprep.subr.mxu0 0.0
          %936 = vmatpush1.msra.mxu0 %v892
          %937 = vmatprep.subr.mxu0 0.0
          %938 = vmatpush1.msra.mxu0 %v891
          %939 = vmatprep.subr.mxu0 0.0
          %940 = vmatpush1.msra.mxu0 %v890
          %941 = vmatprep.subr.mxu0 0.0
          %942 = vmatpush1.msra.mxu0 %v889
          %943 = vmatprep.subr.mxu0 0.0
          %944 = vmatpush1.msra.mxu0 %v888
          %945 = vmatprep.subr.mxu0 0.0
          %946 = vmatpush2.msra.mxu0 0.0
          %947 = vmatprep.subr.mxu0 0.0
          %948 = vmatpush2.msra.mxu0 0.0
          %949 = vmatprep.subr.mxu0 0.0
          %950 = vmatpush2.msra.mxu0 0.0
          %951 = vmatprep.subr.mxu0 0.0
          %952 = vmatpush2.msra.mxu0 0.0
          %953 = vmatprep.subr.mxu0 0.0
          %954 = vmatpush2.msra.mxu0 0.0
          %955 = vmatprep.subr.mxu0 0.0
          %956 = vmatpush2.msra.mxu0 0.0
          %957 = vmatprep.subr.mxu0 0.0
          %958 = vmatpush2.msra.mxu0 0.0
          %959 = vmatprep.subr.mxu0 0.0
          %960 = vmatpush2.msra.mxu0 0.0
          %961 = vmatprep.subr.mxu0 0.0
          %962 = vmatpush2.msra.mxu0 0.0
          %963 = vmatprep.subr.mxu0 0.0
          %964 = vmatpush2.msra.mxu0 0.0
          %965 = vmatprep.subr.mxu0 0.0
          %966 = vmatpush2.msra.mxu0 0.0
          %967 = vmatprep.subr.mxu0 0.0
          %968 = vmatpush2.msra.mxu0 0.0
          %969 = vmatprep.subr.mxu0 0.0
          %970 = vmatpush2.msra.mxu0 0.0
          %971 = vmatprep.subr.mxu0 0.0
          %972 = vmatpush2.msra.mxu0 0.0
          %973 = vmatprep.subr.mxu0 0.0
          %974 = vmatpush2.msra.mxu0 0.0
          %975 = vmatprep.subr.mxu0 0.0
          %976 = vmatpush2.msra.mxu0 0.0
          %977 = vmatprep.mubr.f32.mxu0 0.0
          %978 = vmatmul.mubr.f32.gmra.mxu0 %v911
          %v979 = vpop.f32.mrf.mxu0
          %v980 = vadd.f32 0.0, %v979
          %v981 = vpop.f32.mrf.mxu0
          %982 = vdwg.mxu0
          %v983 = vadd.f32 %v912, %v980
          %vm984 = vcmask 58368
          %985 = vst.msk [vmem:[#allocation3] sm:$0x3] %vm984, %v983
        $region72: #{tpu_custom_call.1} parent=59 // pred_fallthru
          _
        %p986 = scmp.eq.s32.totalorder %s31, 1
        // Predicated region
        $region73: #{tpu_custom_call.1} parent=59 // pred_check
          %p987 = pneg %p986
        $region74: #{tpu_custom_call.1} parent=59 // pred_check_branch
          %989 = sbr.rel (%p987) target = $region76
        $region75: #{tpu_custom_call.1} parent=59 // pred_region
          %v990 = vld [vmem:[#allocation2] sm:$0x3]
          %v991 = vld [vmem:[%s8] sm:$0xff]
          %v992 = vld [vmem:[#allocation3] sm:$0x3]
          %v993 = vld [vmem:[%s9] sm:$0xff]
          %vm994 = vcmask 64512
          %v996 = vsel %vm994, %v992, 0
          %998 = vmatprep.subr.mxu0 0.0
          %999 = vmatpush1.msra.mxu0 0.0
          %1000 = vmatprep.subr.mxu0 0.0
          %1001 = vmatpush1.msra.mxu0 0.0
          %1002 = vmatprep.subr.mxu0 0.0
          %1003 = vmatpush1.msra.mxu0 0.0
          %1004 = vmatprep.subr.mxu0 0.0
          %1005 = vmatpush1.msra.mxu0 0.0
          %1006 = vmatprep.subr.mxu0 0.0
          %1007 = vmatpush1.msra.mxu0 0.0
          %1008 = vmatprep.subr.mxu0 0.0
          %1009 = vmatpush1.msra.mxu0 0.0
          %1010 = vmatprep.subr.mxu0 0.0
          %1011 = vmatpush1.msra.mxu0 0.0
          %1012 = vmatprep.subr.mxu0 0.0
          %1013 = vmatpush1.msra.mxu0 0.0
          %1014 = vmatprep.subr.mxu0 0.0
          %1015 = vmatpush1.msra.mxu0 0.0
          %1016 = vmatprep.subr.mxu0 0.0
          %1017 = vmatpush1.msra.mxu0 0.0
          %1018 = vmatprep.subr.mxu0 0.0
          %1019 = vmatpush1.msra.mxu0 0.0
          %1020 = vmatprep.subr.mxu0 0.0
          %1021 = vmatpush1.msra.mxu0 0.0
          %1022 = vmatprep.subr.mxu0 0.0
          %1023 = vmatpush1.msra.mxu0 0.0
          %1024 = vmatprep.subr.mxu0 0.0
          %1025 = vmatpush1.msra.mxu0 0.0
          %1026 = vmatprep.subr.mxu0 0.0
          %1027 = vmatpush1.msra.mxu0 0.0
          %1028 = vmatprep.subr.mxu0 0.0
          %1029 = vmatpush1.msra.mxu0 %v993
          %1030 = vmatprep.subr.mxu0 0.0
          %1031 = vmatpush2.msra.mxu0 0.0
          %1032 = vmatprep.subr.mxu0 0.0
          %1033 = vmatpush2.msra.mxu0 0.0
          %1034 = vmatprep.subr.mxu0 0.0
          %1035 = vmatpush2.msra.mxu0 0.0
          %1036 = vmatprep.subr.mxu0 0.0
          %1037 = vmatpush2.msra.mxu0 0.0
          %1038 = vmatprep.subr.mxu0 0.0
          %1039 = vmatpush2.msra.mxu0 0.0
          %1040 = vmatprep.subr.mxu0 0.0
          %1041 = vmatpush2.msra.mxu0 0.0
          %1042 = vmatprep.subr.mxu0 0.0
          %1043 = vmatpush2.msra.mxu0 0.0
          %1044 = vmatprep.subr.mxu0 0.0
          %1045 = vmatpush2.msra.mxu0 0.0
          %1046 = vmatprep.subr.mxu0 0.0
          %1047 = vmatpush2.msra.mxu0 0.0
          %1048 = vmatprep.subr.mxu0 0.0
          %1049 = vmatpush2.msra.mxu0 0.0
          %1050 = vmatprep.subr.mxu0 0.0
          %1051 = vmatpush2.msra.mxu0 0.0
          %1052 = vmatprep.subr.mxu0 0.0
          %1053 = vmatpush2.msra.mxu0 0.0
          %1054 = vmatprep.subr.mxu0 0.0
          %1055 = vmatpush2.msra.mxu0 0.0
          %1056 = vmatprep.subr.mxu0 0.0
          %1057 = vmatpush2.msra.mxu0 0.0
          %1058 = vmatprep.subr.mxu0 0.0
          %1059 = vmatpush2.msra.mxu0 0.0
          %1060 = vmatprep.subr.mxu0 0.0
          %1061 = vmatpush2.msra.mxu0 0.0
          %1062 = vmatprep.mubr.f32.mxu0 0.0
          %1063 = vmatmul.mubr.f32.gmra.mxu0 %v996
          %v1064 = vpop.f32.mrf.mxu0
          %v1065 = vadd.f32 0.0, %v1064
          %v1066 = vpop.f32.mrf.mxu0
          %1067 = vdwg.mxu0
          %v1069 = vsel %vm994, %v990, 0
          %1071 = vmatprep.subr.mxu0 0.0
          %1072 = vmatpush1.msra.mxu0 0.0
          %1073 = vmatprep.subr.mxu0 0.0
          %1074 = vmatpush1.msra.mxu0 0.0
          %1075 = vmatprep.subr.mxu0 0.0
          %1076 = vmatpush1.msra.mxu0 0.0
          %1077 = vmatprep.subr.mxu0 0.0
          %1078 = vmatpush1.msra.mxu0 0.0
          %1079 = vmatprep.subr.mxu0 0.0
          %1080 = vmatpush1.msra.mxu0 0.0
          %1081 = vmatprep.subr.mxu0 0.0
          %1082 = vmatpush1.msra.mxu0 0.0
          %1083 = vmatprep.subr.mxu0 0.0
          %1084 = vmatpush1.msra.mxu0 0.0
          %1085 = vmatprep.subr.mxu0 0.0
          %1086 = vmatpush1.msra.mxu0 0.0
          %1087 = vmatprep.subr.mxu0 0.0
          %1088 = vmatpush1.msra.mxu0 0.0
          %1089 = vmatprep.subr.mxu0 0.0
          %1090 = vmatpush1.msra.mxu0 0.0
          %1091 = vmatprep.subr.mxu0 0.0
          %1092 = vmatpush1.msra.mxu0 0.0
          %1093 = vmatprep.subr.mxu0 0.0
          %1094 = vmatpush1.msra.mxu0 0.0
          %1095 = vmatprep.subr.mxu0 0.0
          %1096 = vmatpush1.msra.mxu0 0.0
          %1097 = vmatprep.subr.mxu0 0.0
          %1098 = vmatpush1.msra.mxu0 0.0
          %1099 = vmatprep.subr.mxu0 0.0
          %1100 = vmatpush1.msra.mxu0 0.0
          %1101 = vmatprep.subr.mxu0 0.0
          %1102 = vmatpush1.msra.mxu0 %v991
          %1103 = vmatprep.subr.mxu0 0.0
          %1104 = vmatpush2.msra.mxu0 0.0
          %1105 = vmatprep.subr.mxu0 0.0
          %1106 = vmatpush2.msra.mxu0 0.0
          %1107 = vmatprep.subr.mxu0 0.0
          %1108 = vmatpush2.msra.mxu0 0.0
          %1109 = vmatprep.subr.mxu0 0.0
          %1110 = vmatpush2.msra.mxu0 0.0
          %1111 = vmatprep.subr.mxu0 0.0
          %1112 = vmatpush2.msra.mxu0 0.0
          %1113 = vmatprep.subr.mxu0 0.0
          %1114 = vmatpush2.msra.mxu0 0.0
          %1115 = vmatprep.subr.mxu0 0.0
          %1116 = vmatpush2.msra.mxu0 0.0
          %1117 = vmatprep.subr.mxu0 0.0
          %1118 = vmatpush2.msra.mxu0 0.0
          %1119 = vmatprep.subr.mxu0 0.0
          %1120 = vmatpush2.msra.mxu0 0.0
          %1121 = vmatprep.subr.mxu0 0.0
          %1122 = vmatpush2.msra.mxu0 0.0
          %1123 = vmatprep.subr.mxu0 0.0
          %1124 = vmatpush2.msra.mxu0 0.0
          %1125 = vmatprep.subr.mxu0 0.0
          %1126 = vmatpush2.msra.mxu0 0.0
          %1127 = vmatprep.subr.mxu0 0.0
          %1128 = vmatpush2.msra.mxu0 0.0
          %1129 = vmatprep.subr.mxu0 0.0
          %1130 = vmatpush2.msra.mxu0 0.0
          %1131 = vmatprep.subr.mxu0 0.0
          %1132 = vmatpush2.msra.mxu0 0.0
          %1133 = vmatprep.subr.mxu0 0.0
          %1134 = vmatpush2.msra.mxu0 0.0
          %1135 = vmatprep.mubr.f32.mxu0 0.0
          %1136 = vmatmul.mubr.f32.gmra.mxu0 %v1069
          %v1137 = vpop.f32.mrf.mxu0
          %v1138 = vadd.f32 %v1065, %v1137
          %v1139 = vpop.f32.mrf.mxu0
          %1140 = vdwg.mxu0
          %vm1141 = vcmask 123904
          %1142 = vst.msk [vmem:[%s497] sm:$0x3] %vm1141, %v1138
        $region76: #{tpu_custom_call.1} parent=59 // pred_fallthru
          _
        %s1143 = sand.u32 %s308, 1
        %s1144 = scalar_lea.sflag [#allocation7], %s1143
        %s1145 = sand.u32 %s308, 1
        %s1146 = smul.addr %s1145, 2
        %s1147 = scalar_lea.vmem [#allocation6], %s1146
        // Predicated region
        $region77: #{tpu_custom_call.1} parent=59 // pred_check
          %p1148 = pneg %p318
        $region78: #{tpu_custom_call.1} parent=59 // pred_check_branch
          %1150 = sbr.rel (%p1148) target = $region80
        $region79: #{tpu_custom_call.1} parent=59 // pred_region
          %s1152 = ssub.s32 32, 32
          %1153 = vsyncadd %s1144, %s1152
          %s1154 = smul.addr %s30, 32
          %s1155 = scalar_lea.hbm %s10, %s1154
          %s1157 = sshll.u32 %s1147, 4
          %s1158 = int_to_ptr.vmem [resolvable:$true] %s1157
          %1160 = dma.vmem_to_hbm [thread:$0]  %s1158, 32, %s1155, %s1144
        $region80: #{tpu_custom_call.1} parent=59 // pred_fallthru
          _
      $region60: #{tpu_custom_call.1} parent=5 // pred_fallthru
        _
      %p1161 = scmp.le.s32.totalorder 2, %s21
      // Predicated region
      $region81: #{tpu_custom_call.1} parent=5 // pred_check
        %p1162 = pneg %p1161
      $region82: #{tpu_custom_call.1} parent=5 // pred_check_branch
        %1164 = sbr.rel (%p1162) target = $region84
      $region83: #{tpu_custom_call.1} parent=5 // pred_region
        %s1165 = ssub.s32 %s21, 2
        // Predicated region
        $region85: #{tpu_custom_call.1} parent=83 // pred_check
          %p1166 = pneg %p324
        $region86: #{tpu_custom_call.1} parent=83 // pred_check_branch
          %1168 = sbr.rel (%p1166) target = $region88
        $region87: #{tpu_custom_call.1} parent=83 // pred_region
          %s1169 = sand.u32 %s309, 1
          %s1170 = scalar_lea.sflag [#allocation7], %s1169
          %s1171 = sand.u32 %s309, 1
          %s1172 = smul.addr %s1171, 2
          %s1173 = scalar_lea.vmem [#allocation6], %s1172
          %1174 = dma.done %s1170, 32
        $region88: #{tpu_custom_call.1} parent=83 // pred_fallthru
          _
      $region84: #{tpu_custom_call.1} parent=5 // pred_fallthru
        _
    $region6: #{tpu_custom_call.1} parent=1 // loop_footer
      %s25 = sadd.s32 1, %s21
    $region7: #{tpu_custom_call.1} parent=1 // loop_footer_branch
      %20 = sbr.rel target = $region3
    $region8: #{tpu_custom_call.1} parent=1 // loop_exit
      _
    %1175 = vsyncpa [#allocation7], 1
    %s1176 = scalar_lea.sflag [#allocation7], 1
    %1177 = vsyncpa %s1176, 1

</llo_original>
